<compile_context>
chip_gen: v7x
topology: tpu7x:2x2x1
jax: 0.10.0
libtpu: 0.0.40
codegen_flags: <defaults>
</compile_context>

<pallas_src>
import jax
import jax.numpy as jnp
from jax.experimental import pallas as pl
from jax.experimental.pallas import tpu as pltpu


def _fused_kernel_folded(x_ref, w_ref, b1_ref, b2_ref, o_ref):
    # x : (Cin, M)    channel-major activations
    # w : (Cout, Cin) conv weight with BN1 scale (cols) and BN2 scale (rows) folded
    # b1: (Cin, 1)    BN1 shift divided by BN1 scale
    # b2: (Cout, 1)   BN2 shift
    x = x_ref[...].astype(jnp.float32)
    z = jnp.maximum(x + b1_ref[...], 0.0)                      # BN1 (folded) + ReLU
    w = w_ref[...].astype(jnp.float32)                         # bf16 or f32 storage -> f32
    y = jnp.dot(w, z, preferred_element_type=jnp.float32)      # 1x1 conv on the MXU
    o_ref[...] = jnp.maximum(y + b2_ref[...], 0.0).astype(o_ref.dtype)  # BN2 shift + ReLU


def _fused_kernel_general(x_ref, w_ref, s1_ref, b1_ref, b2_ref, o_ref):
    # Fallback path (used only if some s1 <= 0, where the s1-into-W fold is invalid).
    x = x_ref[...].astype(jnp.float32)
    z = jnp.maximum(x * s1_ref[...] + b1_ref[...], 0.0)
    w = w_ref[...].astype(jnp.float32)
    y = jnp.dot(w, z, preferred_element_type=jnp.float32)
    o_ref[...] = jnp.maximum(y + b2_ref[...], 0.0).astype(o_ref.dtype)


def make_fused_fn(conv_w, gamma1, beta1, mean1, var1,
                  gamma2, beta2, mean2, var2, eps=1e-5,
                  weight_dtype=jnp.float32):
    """Precompute (once) the folded BN constants and return a jitted fn of x only."""
    Cout, Cin = conv_w.shape
    f32 = jnp.float32

    # BN1 folded to per-input-channel scale/shift (eval semantics).
    inv1 = 1.0 / jnp.sqrt(var1.astype(f32) + eps)
    s1 = gamma1.astype(f32) * inv1                              # (Cin,)
    b1 = beta1.astype(f32) - mean1.astype(f32) * s1             # (Cin,)

    # BN2: scale goes into the weight rows (valid post-matmul), shift stays.
    inv2 = 1.0 / jnp.sqrt(var2.astype(f32) + eps)
    s2 = gamma2.astype(f32) * inv2                              # (Cout,)
    b2 = (beta2.astype(f32) - mean2.astype(f32) * s2).reshape(Cout, 1)

    w = conv_w.astype(f32) * s2[:, None]                        # (Cout, Cin)

    # Fold BN1 scale into weight columns only when valid (all s1 > 0).
    fold_s1 = bool(jnp.all(s1 > 0.0))
    if fold_s1:
        w = w * s1[None, :]
        b1_col = (b1 / s1).reshape(Cin, 1)
        s1_col = None
    else:
        b1_col = b1.reshape(Cin, 1)
        s1_col = s1.reshape(Cin, 1)

    # Weight storage dtype (bf16 halves its HBM traffic; accumulation stays f32).
    w = w.astype(weight_dtype)
    w_bytes = Cout * Cin * jnp.dtype(weight_dtype).itemsize

    # Materialize folded constants now (one-time cost, not per call).
    jax.block_until_ready([a for a in (w, s1_col, b1_col, b2) if a is not None])

    @jax.jit
    def fused(x_nchw):
        N, Cin_, H, W_sp = x_nchw.shape
        M = N * H * W_sp

        if N == 1:
            # Free reshape: NCHW with N=1 is already channel-major contiguous.
            x_cm = x_nchw.reshape(Cin_, M)
        else:
            # Fallback for N > 1 (not hit by this module's spec).
            x_cm = jnp.transpose(x_nchw, (1, 0, 2, 3)).reshape(Cin_, M)

        flops = 2 * M * Cin_ * Cout
        bytes_accessed = 4 * Cin_ * M + w_bytes + 4 * Cout * M + 4 * (Cin_ + Cout)

        x_spec = pl.BlockSpec((Cin_, M), lambda i: (0, 0))
        w_spec = pl.BlockSpec((Cout, Cin_), lambda i: (0, 0))
        cin_vec = pl.BlockSpec((Cin_, 1), lambda i: (0, 0))
        cout_vec = pl.BlockSpec((Cout, 1), lambda i: (0, 0))

        if fold_s1:
            kernel = _fused_kernel_folded
            operands = (x_cm, w, b1_col, b2)
            in_specs = [x_spec, w_spec, cin_vec, cout_vec]
        else:
            kernel = _fused_kernel_general
            operands = (x_cm, w, s1_col, b1_col, b2)
            in_specs = [x_spec, w_spec, cin_vec, cin_vec, cout_vec]

        out_flat = pl.pallas_call(
            kernel,
            out_shape=jax.ShapeDtypeStruct((Cout, M), x_nchw.dtype),
            grid=(1,),
            in_specs=in_specs,
            out_specs=pl.BlockSpec((Cout, M), lambda i: (0, 0)),
            compiler_params=pltpu.CompilerParams(
                dimension_semantics=("arbitrary",)),
            cost_estimate=pl.CostEstimate(
                flops=flops, transcendentals=0, bytes_accessed=bytes_accessed),
        )(*operands)

        if N == 1:
            return out_flat.reshape(1, Cout, H, W_sp)           # free reshape
        return jnp.transpose(out_flat.reshape(Cout, N, H, W_sp), (1, 0, 2, 3))

    return fused


def _reference(x_nchw, conv_w, gamma1, beta1, mean1, var1,
               gamma2, beta2, mean2, var2, eps=1e-5):
    # Pure-JAX reference (eval-mode BN).
    def bn(x, g, b, m, v):
        g = g.reshape(1, -1, 1, 1); b = b.reshape(1, -1, 1, 1)
        m = m.reshape(1, -1, 1, 1); v = v.reshape(1, -1, 1, 1)
        return (x - m) / jnp.sqrt(v + eps) * g + b
    z = jnp.maximum(bn(x_nchw, gamma1, beta1, mean1, var1), 0.0)
    y = jnp.einsum("nchw,oc->nohw", z, conv_w)
    return jnp.maximum(bn(y, gamma2, beta2, mean2, var2), 0.0)


if __name__ == "__main__":
    Cin, Cout, H, W, N = 864, 192, 14, 14, 1

    key = jax.random.PRNGKey(0)
    keys = jax.random.split(key, 10)

    x = jax.random.normal(keys[0], (N, Cin, H, W), dtype=jnp.float32)
    conv_w = jax.random.normal(keys[1], (Cout, Cin), dtype=jnp.float32) * 0.02

    gamma1 = 1.0 + 0.1 * jax.random.normal(keys[2], (Cin,), dtype=jnp.float32)
    beta1 = 0.1 * jax.random.normal(keys[3], (Cin,), dtype=jnp.float32)
    mean1 = 0.05 * jax.random.normal(keys[4], (Cin,), dtype=jnp.float32)
    var1 = 1.0 + 0.1 * jnp.abs(jax.random.normal(keys[5], (Cin,), dtype=jnp.float32))

    gamma2 = 1.0 + 0.1 * jax.random.normal(keys[6], (Cout,), dtype=jnp.float32)
    beta2 = 0.1 * jax.random.normal(keys[7], (Cout,), dtype=jnp.float32)
    mean2 = 0.05 * jax.random.normal(keys[8], (Cout,), dtype=jnp.float32)
    var2 = 1.0 + 0.1 * jnp.abs(jax.random.normal(keys[9], (Cout,), dtype=jnp.float32))

    bn_args = (gamma1, beta1, mean1, var1, gamma2, beta2, mean2, var2)

    ref = jax.block_until_ready(_reference(x, conv_w, *bn_args))

    def _within_tol(out):
        return bool(jnp.allclose(out, ref, atol=1e-3, rtol=1e-3))

    # Preferred variant per the perf review: bf16-stored weight (~20% less HBM
    # traffic on a DMA-bound kernel), f32 accumulation.  The review requires the
    # accuracy impact to be re-validated (not assumed), so validate it here and
    # fall back to the f32-weight kernel if the 1e-3 tolerance is not met.
    fused = make_fused_fn(conv_w, *bn_args, weight_dtype=jnp.bfloat16)
    out = jax.block_until_ready(fused(x))
    if not _within_tol(out):
        fused = make_fused_fn(conv_w, *bn_args, weight_dtype=jnp.float32)
        out = jax.block_until_ready(fused(x))

    assert out.shape == (N, Cout, H, W), out.shape
    assert _within_tol(out), float(jnp.max(jnp.abs(out - ref)))

    print("KERNEL_OK")
</pallas_src>

<mosaic_0001>
module attributes {stable_mosaic.version = 11 : i64} {
  func.func @_fused_kernel_folded(%arg0: i32, %arg1: memref<864x196xf32, #tpu.memory_space<vmem>>, %arg2: memref<192x864xbf16, #tpu.memory_space<vmem>>, %arg3: memref<864x1xf32, #tpu.memory_space<vmem>>, %arg4: memref<192x1xf32, #tpu.memory_space<vmem>>, %arg5: memref<192x196xf32, #tpu.memory_space<vmem>>) attributes {dimension_semantics = [#tpu.dimension_semantics<arbitrary>], iteration_bounds = array<i64: 1>, scalar_prefetch = 0 : i64, scratch_operands = 0 : i64, tpu.core_type = #tpu.core_type<tc>, window_params = [{pipeline_mode = #tpu.pipeline_mode<synchronous>, transform_indices = @transform_0, window_bounds = array<i64: 864, 196>}, {pipeline_mode = #tpu.pipeline_mode<synchronous>, transform_indices = @transform_1, window_bounds = array<i64: 192, 864>}, {pipeline_mode = #tpu.pipeline_mode<synchronous>, transform_indices = @transform_2, window_bounds = array<i64: 864, 1>}, {pipeline_mode = #tpu.pipeline_mode<synchronous>, transform_indices = @transform_3, window_bounds = array<i64: 192, 1>}, {pipeline_mode = #tpu.pipeline_mode<synchronous>, transform_indices = @transform_4, window_bounds = array<i64: 192, 196>}]} {
    %c0 = arith.constant 0 : index
    %c0_0 = arith.constant 0 : index
    %0 = vector.load %arg1[%c0, %c0_0] : memref<864x196xf32, #tpu.memory_space<vmem>>, vector<864x196xf32>
    %c0_1 = arith.constant 0 : index
    %c0_2 = arith.constant 0 : index
    %1 = vector.load %arg3[%c0_1, %c0_2] : memref<864x1xf32, #tpu.memory_space<vmem>>, vector<864x1xf32>
    %2 = vector.broadcast %1 : vector<864x1xf32> to vector<864x196xf32>
    %3 = arith.addf %0, %2 : vector<864x196xf32>
    %cst = arith.constant 0.000000e+00 : f32
    %4 = vector.broadcast %cst : f32 to vector<864x196xf32>
    %5 = arith.maximumf %3, %4 : vector<864x196xf32>
    %c0_3 = arith.constant 0 : index
    %c0_4 = arith.constant 0 : index
    %6 = vector.load %arg2[%c0_3, %c0_4] : memref<192x864xbf16, #tpu.memory_space<vmem>>, vector<192x864xbf16>
    %7 = arith.extf %6 : vector<192x864xbf16> to vector<192x864xf32>
    %cst_5 = arith.constant dense<0.000000e+00> : vector<192x196xf32>
    %8 = tpu.matmul %7, %5, %cst_5 {dimension_numbers = #tpu.dot_dimension_numbers<[1], [0], [0], [1], [0, 0, 1, 1], [], []>} : vector<192x864xf32>, vector<864x196xf32>, vector<192x196xf32> -> vector<192x196xf32>
    %c0_6 = arith.constant 0 : index
    %c0_7 = arith.constant 0 : index
    %9 = vector.load %arg4[%c0_6, %c0_7] : memref<192x1xf32, #tpu.memory_space<vmem>>, vector<192x1xf32>
    %10 = vector.broadcast %9 : vector<192x1xf32> to vector<192x196xf32>
    %11 = arith.addf %8, %10 : vector<192x196xf32>
    %cst_8 = arith.constant 0.000000e+00 : f32
    %12 = vector.broadcast %cst_8 : f32 to vector<192x196xf32>
    %13 = arith.maximumf %11, %12 : vector<192x196xf32>
    %c0_9 = arith.constant 0 : index
    %c0_10 = arith.constant 0 : index
    %14 = vector.load %arg5[%c0_9, %c0_10] : memref<192x196xf32, #tpu.memory_space<vmem>>, vector<192x196xf32>
    tpu.vector_store %arg5[%c0_9, %c0_10], %13 {strides = array<i32>} : memref<192x196xf32, #tpu.memory_space<vmem>>, vector<192x196xf32>,
    return
  }
  func.func @transform_0(%arg0: i32) -> (i32, i32) {
    %c0_i32 = arith.constant 0 : i32
    %c0_i32_0 = arith.constant 0 : i32
    %c0_i32_1 = arith.constant 0 : i32
    return %c0_i32, %c0_i32_0 : i32, i32
  }
  func.func @transform_1(%arg0: i32) -> (i32, i32) {
    %c0_i32 = arith.constant 0 : i32
    %c0_i32_0 = arith.constant 0 : i32
    %c0_i32_1 = arith.constant 0 : i32
    return %c0_i32, %c0_i32_0 : i32, i32
  }
  func.func @transform_2(%arg0: i32) -> (i32, i32) {
    %c0_i32 = arith.constant 0 : i32
    %c0_i32_0 = arith.constant 0 : i32
    %c0_i32_1 = arith.constant 0 : i32
    return %c0_i32, %c0_i32_0 : i32, i32
  }
  func.func @transform_3(%arg0: i32) -> (i32, i32) {
    %c0_i32 = arith.constant 0 : i32
    %c0_i32_0 = arith.constant 0 : i32
    %c0_i32_1 = arith.constant 0 : i32
    return %c0_i32, %c0_i32_0 : i32, i32
  }
  func.func @transform_4(%arg0: i32) -> (i32, i32) {
    %c0_i32 = arith.constant 0 : i32
    %c0_i32_0 = arith.constant 0 : i32
    %c0_i32_1 = arith.constant 0 : i32
    return %c0_i32, %c0_i32_0 : i32, i32
  }
}

</mosaic_0001>

<llo_original>
// kernel: fused.1
$region0: #{fused.1}
  #allocation0 [shape = 'u32[]', space=smem, size = 0x4, offset = 0x4, fixed_abs, tag = 'smem constant byte address 0x4 - core index']
  #allocation1 [shape = 'u32[144,128]{1,0:T(1,128)}', space=vmem, size = 0x12000, scoped, tag = 'internal scratch']
  %s0 = inlined_call_operand.vmem [shape: f32[864,196], index: 0, kind: input, shape index: {}]
  %s1 = inlined_call_operand.vmem [shape: bf16[192,864], index: 1, kind: input, shape index: {}]
  %s2 = inlined_call_operand.vmem [shape: f32[864,1], index: 2, kind: input, shape index: {}]
  %s3 = inlined_call_operand.vmem [shape: f32[192,1], index: 3, kind: input, shape index: {}]
  %s4 = inlined_call_operand.vmem [shape: f32[192,196], index: 4, kind: output, shape index: {}]
  %s5 = sld [smem:[#allocation0]]
  $region26: #{fused.1} parent=0
    _
  %s7 = ssub.s32 1, %s5
  %s8 = scalar_select 0, %s7, %s5
  // Predicated region
  $region2: #{fused.1} parent=0 // pred_check
    _
  $region3: #{fused.1} parent=0 // pred_check_branch
    %10 = sbr.rel (0) target = $region5
  $region4: #{fused.1} parent=0 // pred_region
    _
  $region5: #{fused.1} parent=0 // pred_fallthru
    _
  // Predicated region
  $region6: #{fused.1} parent=0 // pred_check
    _
  $region7: #{fused.1} parent=0 // pred_check_branch
    %12 = sbr.rel (0) target = $region9
  $region8: #{fused.1} parent=0 // pred_region
    _
  $region9: #{fused.1} parent=0 // pred_fallthru
    _
  // Predicated region
  $region10: #{fused.1} parent=0 // pred_check
    _
  $region11: #{fused.1} parent=0 // pred_check_branch
    %14 = sbr.rel (0) target = $region13
  $region12: #{fused.1} parent=0 // pred_region
    _
  $region13: #{fused.1} parent=0 // pred_fallthru
    _
  // Predicated region
  $region14: #{fused.1} parent=0 // pred_check
    _
  $region15: #{fused.1} parent=0 // pred_check_branch
    %16 = sbr.rel (0) target = $region17
  $region16: #{fused.1} parent=0 // pred_region
    _
  $region17: #{fused.1} parent=0 // pred_fallthru
    _
  %v17 = vld [vmem:[%s0] sm:$0xff]
  %v18 = vld [vmem:[%s0 + $0x8] sm:$0xff]
  %v19 = vld [vmem:[%s0 + $0x10] sm:$0xff]
  %v20 = vld [vmem:[%s0 + $0x18] sm:$0xff]
  %v21 = vld [vmem:[%s0 + $0x20] sm:$0xff]
  %v22 = vld [vmem:[%s0 + $0x28] sm:$0xff]
  %v23 = vld [vmem:[%s0 + $0x30] sm:$0xff]
  %v24 = vld [vmem:[%s0 + $0x38] sm:$0xff]
  %v25 = vld [vmem:[%s0 + $0x40] sm:$0xff]
  %v26 = vld [vmem:[%s0 + $0x48] sm:$0xff]
  %v27 = vld [vmem:[%s0 + $0x50] sm:$0xff]
  %v28 = vld [vmem:[%s0 + $0x58] sm:$0xff]
  %v29 = vld [vmem:[%s0 + $0x60] sm:$0xff]
  %v30 = vld [vmem:[%s0 + $0x68] sm:$0xff]
  %v31 = vld [vmem:[%s0 + $0x70] sm:$0xff]
  %v32 = vld [vmem:[%s0 + $0x78] sm:$0xff]
  %v33 = vld [vmem:[%s0 + $0x80] sm:$0xff]
  %v34 = vld [vmem:[%s0 + $0x88] sm:$0xff]
  %v35 = vld [vmem:[%s0 + $0x90] sm:$0xff]
  %v36 = vld [vmem:[%s0 + $0x98] sm:$0xff]
  %v37 = vld [vmem:[%s0 + $0xa0] sm:$0xff]
  %v38 = vld [vmem:[%s0 + $0xa8] sm:$0xff]
  %v39 = vld [vmem:[%s0 + $0xb0] sm:$0xff]
  %v40 = vld [vmem:[%s0 + $0xb8] sm:$0xff]
  %v41 = vld [vmem:[%s0 + $0xc0] sm:$0xff]
  %v42 = vld [vmem:[%s0 + $0xc8] sm:$0xff]
  %v43 = vld [vmem:[%s0 + $0xd0] sm:$0xff]
  %v44 = vld [vmem:[%s0 + $0xd8] sm:$0xff]
  %v45 = vld [vmem:[%s0 + $0xe0] sm:$0xff]
  %v46 = vld [vmem:[%s0 + $0xe8] sm:$0xff]
  %v47 = vld [vmem:[%s0 + $0xf0] sm:$0xff]
  %v48 = vld [vmem:[%s0 + $0xf8] sm:$0xff]
  %v49 = vld [vmem:[%s0 + $0x100] sm:$0xff]
  %v50 = vld [vmem:[%s0 + $0x108] sm:$0xff]
  %v51 = vld [vmem:[%s0 + $0x110] sm:$0xff]
  %v52 = vld [vmem:[%s0 + $0x118] sm:$0xff]
  %v53 = vld [vmem:[%s0 + $0x120] sm:$0xff]
  %v54 = vld [vmem:[%s0 + $0x128] sm:$0xff]
  %v55 = vld [vmem:[%s0 + $0x130] sm:$0xff]
  %v56 = vld [vmem:[%s0 + $0x138] sm:$0xff]
  %v57 = vld [vmem:[%s0 + $0x140] sm:$0xff]
  %v58 = vld [vmem:[%s0 + $0x148] sm:$0xff]
  %v59 = vld [vmem:[%s0 + $0x150] sm:$0xff]
  %v60 = vld [vmem:[%s0 + $0x158] sm:$0xff]
  %v61 = vld [vmem:[%s0 + $0x160] sm:$0xff]
  %v62 = vld [vmem:[%s0 + $0x168] sm:$0xff]
  %v63 = vld [vmem:[%s0 + $0x170] sm:$0xff]
  %v64 = vld [vmem:[%s0 + $0x178] sm:$0xff]
  %v65 = vld [vmem:[%s0 + $0x180] sm:$0xff]
  %v66 = vld [vmem:[%s0 + $0x188] sm:$0xff]
  %v67 = vld [vmem:[%s0 + $0x190] sm:$0xff]
  %v68 = vld [vmem:[%s0 + $0x198] sm:$0xff]
  %v69 = vld [vmem:[%s0 + $0x1a0] sm:$0xff]
  %v70 = vld [vmem:[%s0 + $0x1a8] sm:$0xff]
  %v71 = vld [vmem:[%s0 + $0x1b0] sm:$0xff]
  %v72 = vld [vmem:[%s0 + $0x1b8] sm:$0xff]
  %v73 = vld [vmem:[%s0 + $0x1c0] sm:$0xff]
  %v74 = vld [vmem:[%s0 + $0x1c8] sm:$0xff]
  %v75 = vld [vmem:[%s0 + $0x1d0] sm:$0xff]
  %v76 = vld [vmem:[%s0 + $0x1d8] sm:$0xff]
  %v77 = vld [vmem:[%s0 + $0x1e0] sm:$0xff]
  %v78 = vld [vmem:[%s0 + $0x1e8] sm:$0xff]
  %v79 = vld [vmem:[%s0 + $0x1f0] sm:$0xff]
  %v80 = vld [vmem:[%s0 + $0x1f8] sm:$0xff]
  %v81 = vld [vmem:[%s0 + $0x200] sm:$0xff]
  %v82 = vld [vmem:[%s0 + $0x208] sm:$0xff]
  %v83 = vld [vmem:[%s0 + $0x210] sm:$0xff]
  %v84 = vld [vmem:[%s0 + $0x218] sm:$0xff]
  %v85 = vld [vmem:[%s0 + $0x220] sm:$0xff]
  %v86 = vld [vmem:[%s0 + $0x228] sm:$0xff]
  %v87 = vld [vmem:[%s0 + $0x230] sm:$0xff]
  %v88 = vld [vmem:[%s0 + $0x238] sm:$0xff]
  %v89 = vld [vmem:[%s0 + $0x240] sm:$0xff]
  %v90 = vld [vmem:[%s0 + $0x248] sm:$0xff]
  %v91 = vld [vmem:[%s0 + $0x250] sm:$0xff]
  %v92 = vld [vmem:[%s0 + $0x258] sm:$0xff]
  %v93 = vld [vmem:[%s0 + $0x260] sm:$0xff]
  %v94 = vld [vmem:[%s0 + $0x268] sm:$0xff]
  %v95 = vld [vmem:[%s0 + $0x270] sm:$0xff]
  %v96 = vld [vmem:[%s0 + $0x278] sm:$0xff]
  %v97 = vld [vmem:[%s0 + $0x280] sm:$0xff]
  %v98 = vld [vmem:[%s0 + $0x288] sm:$0xff]
  %v99 = vld [vmem:[%s0 + $0x290] sm:$0xff]
  %v100 = vld [vmem:[%s0 + $0x298] sm:$0xff]
  %v101 = vld [vmem:[%s0 + $0x2a0] sm:$0xff]
  %v102 = vld [vmem:[%s0 + $0x2a8] sm:$0xff]
  %v103 = vld [vmem:[%s0 + $0x2b0] sm:$0xff]
  %v104 = vld [vmem:[%s0 + $0x2b8] sm:$0xff]
  %v105 = vld [vmem:[%s0 + $0x2c0] sm:$0xff]
  %v106 = vld [vmem:[%s0 + $0x2c8] sm:$0xff]
  %v107 = vld [vmem:[%s0 + $0x2d0] sm:$0xff]
  %v108 = vld [vmem:[%s0 + $0x2d8] sm:$0xff]
  %v109 = vld [vmem:[%s0 + $0x2e0] sm:$0xff]
  %v110 = vld [vmem:[%s0 + $0x2e8] sm:$0xff]
  %v111 = vld [vmem:[%s0 + $0x2f0] sm:$0xff]
  %v112 = vld [vmem:[%s0 + $0x2f8] sm:$0xff]
  %v113 = vld [vmem:[%s0 + $0x300] sm:$0xff]
  %v114 = vld [vmem:[%s0 + $0x308] sm:$0xff]
  %v115 = vld [vmem:[%s0 + $0x310] sm:$0xff]
  %v116 = vld [vmem:[%s0 + $0x318] sm:$0xff]
  %v117 = vld [vmem:[%s0 + $0x320] sm:$0xff]
  %v118 = vld [vmem:[%s0 + $0x328] sm:$0xff]
  %v119 = vld [vmem:[%s0 + $0x330] sm:$0xff]
  %v120 = vld [vmem:[%s0 + $0x338] sm:$0xff]
  %v121 = vld [vmem:[%s0 + $0x340] sm:$0xff]
  %v122 = vld [vmem:[%s0 + $0x348] sm:$0xff]
  %v123 = vld [vmem:[%s0 + $0x350] sm:$0xff]
  %v124 = vld [vmem:[%s0 + $0x358] sm:$0xff]
  %v125 = vld [vmem:[%s0 + $0x360] sm:$0xff]
  %v126 = vld [vmem:[%s0 + $0x368] sm:$0xff]
  %v127 = vld [vmem:[%s0 + $0x370] sm:$0xff]
  %v128 = vld [vmem:[%s0 + $0x378] sm:$0xff]
  %v129 = vld [vmem:[%s0 + $0x380] sm:$0xff]
  %v130 = vld [vmem:[%s0 + $0x388] sm:$0xff]
  %v131 = vld [vmem:[%s0 + $0x390] sm:$0xff]
  %v132 = vld [vmem:[%s0 + $0x398] sm:$0xff]
  %v133 = vld [vmem:[%s0 + $0x3a0] sm:$0xff]
  %v134 = vld [vmem:[%s0 + $0x3a8] sm:$0xff]
  %v135 = vld [vmem:[%s0 + $0x3b0] sm:$0xff]
  %v136 = vld [vmem:[%s0 + $0x3b8] sm:$0xff]
  %v137 = vld [vmem:[%s0 + $0x3c0] sm:$0xff]
  %v138 = vld [vmem:[%s0 + $0x3c8] sm:$0xff]
  %v139 = vld [vmem:[%s0 + $0x3d0] sm:$0xff]
  %v140 = vld [vmem:[%s0 + $0x3d8] sm:$0xff]
  %v141 = vld [vmem:[%s0 + $0x3e0] sm:$0xff]
  %v142 = vld [vmem:[%s0 + $0x3e8] sm:$0xff]
  %v143 = vld [vmem:[%s0 + $0x3f0] sm:$0xff]
  %v144 = vld [vmem:[%s0 + $0x3f8] sm:$0xff]
  %v145 = vld [vmem:[%s0 + $0x400] sm:$0xff]
  %v146 = vld [vmem:[%s0 + $0x408] sm:$0xff]
  %v147 = vld [vmem:[%s0 + $0x410] sm:$0xff]
  %v148 = vld [vmem:[%s0 + $0x418] sm:$0xff]
  %v149 = vld [vmem:[%s0 + $0x420] sm:$0xff]
  %v150 = vld [vmem:[%s0 + $0x428] sm:$0xff]
  %v151 = vld [vmem:[%s0 + $0x430] sm:$0xff]
  %v152 = vld [vmem:[%s0 + $0x438] sm:$0xff]
  %v153 = vld [vmem:[%s0 + $0x440] sm:$0xff]
  %v154 = vld [vmem:[%s0 + $0x448] sm:$0xff]
  %v155 = vld [vmem:[%s0 + $0x450] sm:$0xff]
  %v156 = vld [vmem:[%s0 + $0x458] sm:$0xff]
  %v157 = vld [vmem:[%s0 + $0x460] sm:$0xff]
  %v158 = vld [vmem:[%s0 + $0x468] sm:$0xff]
  %v159 = vld [vmem:[%s0 + $0x470] sm:$0xff]
  %v160 = vld [vmem:[%s0 + $0x478] sm:$0xff]
  %v161 = vld [vmem:[%s0 + $0x480] sm:$0xff]
  %v162 = vld [vmem:[%s0 + $0x488] sm:$0xff]
  %v163 = vld [vmem:[%s0 + $0x490] sm:$0xff]
  %v164 = vld [vmem:[%s0 + $0x498] sm:$0xff]
  %v165 = vld [vmem:[%s0 + $0x4a0] sm:$0xff]
  %v166 = vld [vmem:[%s0 + $0x4a8] sm:$0xff]
  %v167 = vld [vmem:[%s0 + $0x4b0] sm:$0xff]
  %v168 = vld [vmem:[%s0 + $0x4b8] sm:$0xff]
  %v169 = vld [vmem:[%s0 + $0x4c0] sm:$0xff]
  %v170 = vld [vmem:[%s0 + $0x4c8] sm:$0xff]
  %v171 = vld [vmem:[%s0 + $0x4d0] sm:$0xff]
  %v172 = vld [vmem:[%s0 + $0x4d8] sm:$0xff]
  %v173 = vld [vmem:[%s0 + $0x4e0] sm:$0xff]
  %v174 = vld [vmem:[%s0 + $0x4e8] sm:$0xff]
  %v175 = vld [vmem:[%s0 + $0x4f0] sm:$0xff]
  %v176 = vld [vmem:[%s0 + $0x4f8] sm:$0xff]
  %v177 = vld [vmem:[%s0 + $0x500] sm:$0xff]
  %v178 = vld [vmem:[%s0 + $0x508] sm:$0xff]
  %v179 = vld [vmem:[%s0 + $0x510] sm:$0xff]
  %v180 = vld [vmem:[%s0 + $0x518] sm:$0xff]
  %v181 = vld [vmem:[%s0 + $0x520] sm:$0xff]
  %v182 = vld [vmem:[%s0 + $0x528] sm:$0xff]
  %v183 = vld [vmem:[%s0 + $0x530] sm:$0xff]
  %v184 = vld [vmem:[%s0 + $0x538] sm:$0xff]
  %v185 = vld [vmem:[%s0 + $0x540] sm:$0xff]
  %v186 = vld [vmem:[%s0 + $0x548] sm:$0xff]
  %v187 = vld [vmem:[%s0 + $0x550] sm:$0xff]
  %v188 = vld [vmem:[%s0 + $0x558] sm:$0xff]
  %v189 = vld [vmem:[%s0 + $0x560] sm:$0xff]
  %v190 = vld [vmem:[%s0 + $0x568] sm:$0xff]
  %v191 = vld [vmem:[%s0 + $0x570] sm:$0xff]
  %v192 = vld [vmem:[%s0 + $0x578] sm:$0xff]
  %v193 = vld [vmem:[%s0 + $0x580] sm:$0xff]
  %v194 = vld [vmem:[%s0 + $0x588] sm:$0xff]
  %v195 = vld [vmem:[%s0 + $0x590] sm:$0xff]
  %v196 = vld [vmem:[%s0 + $0x598] sm:$0xff]
  %v197 = vld [vmem:[%s0 + $0x5a0] sm:$0xff]
  %v198 = vld [vmem:[%s0 + $0x5a8] sm:$0xff]
  %v199 = vld [vmem:[%s0 + $0x5b0] sm:$0xff]
  %v200 = vld [vmem:[%s0 + $0x5b8] sm:$0xff]
  %v201 = vld [vmem:[%s0 + $0x5c0] sm:$0xff]
  %v202 = vld [vmem:[%s0 + $0x5c8] sm:$0xff]
  %v203 = vld [vmem:[%s0 + $0x5d0] sm:$0xff]
  %v204 = vld [vmem:[%s0 + $0x5d8] sm:$0xff]
  %v205 = vld [vmem:[%s0 + $0x5e0] sm:$0xff]
  %v206 = vld [vmem:[%s0 + $0x5e8] sm:$0xff]
  %v207 = vld [vmem:[%s0 + $0x5f0] sm:$0xff]
  %v208 = vld [vmem:[%s0 + $0x5f8] sm:$0xff]
  %v209 = vld [vmem:[%s0 + $0x600] sm:$0xff]
  %v210 = vld [vmem:[%s0 + $0x608] sm:$0xff]
  %v211 = vld [vmem:[%s0 + $0x610] sm:$0xff]
  %v212 = vld [vmem:[%s0 + $0x618] sm:$0xff]
  %v213 = vld [vmem:[%s0 + $0x620] sm:$0xff]
  %v214 = vld [vmem:[%s0 + $0x628] sm:$0xff]
  %v215 = vld [vmem:[%s0 + $0x630] sm:$0xff]
  %v216 = vld [vmem:[%s0 + $0x638] sm:$0xff]
  %v217 = vld [vmem:[%s0 + $0x640] sm:$0xff]
  %v218 = vld [vmem:[%s0 + $0x648] sm:$0xff]
  %v219 = vld [vmem:[%s0 + $0x650] sm:$0xff]
  %v220 = vld [vmem:[%s0 + $0x658] sm:$0xff]
  %v221 = vld [vmem:[%s0 + $0x660] sm:$0xff]
  %v222 = vld [vmem:[%s0 + $0x668] sm:$0xff]
  %v223 = vld [vmem:[%s0 + $0x670] sm:$0xff]
  %v224 = vld [vmem:[%s0 + $0x678] sm:$0xff]
  %v225 = vld [vmem:[%s0 + $0x680] sm:$0xff]
  %v226 = vld [vmem:[%s0 + $0x688] sm:$0xff]
  %v227 = vld [vmem:[%s0 + $0x690] sm:$0xff]
  %v228 = vld [vmem:[%s0 + $0x698] sm:$0xff]
  %v229 = vld [vmem:[%s0 + $0x6a0] sm:$0xff]
  %v230 = vld [vmem:[%s0 + $0x6a8] sm:$0xff]
  %v231 = vld [vmem:[%s0 + $0x6b0] sm:$0xff]
  %v232 = vld [vmem:[%s0 + $0x6b8] sm:$0xff]
  %v233 = vld [vmem:[%s2] sm:$0xff]
  %v234 = vld [vmem:[%s2 + $0x8] sm:$0xff]
  %v235 = vld [vmem:[%s2 + $0x10] sm:$0xff]
  %v236 = vld [vmem:[%s2 + $0x18] sm:$0xff]
  %v237 = vld [vmem:[%s2 + $0x20] sm:$0xff]
  %v238 = vld [vmem:[%s2 + $0x28] sm:$0xff]
  %v239 = vld [vmem:[%s2 + $0x30] sm:$0xff]
  %v240 = vld [vmem:[%s2 + $0x38] sm:$0xff]
  %v241 = vld [vmem:[%s2 + $0x40] sm:$0xff]
  %v242 = vld [vmem:[%s2 + $0x48] sm:$0xff]
  %v243 = vld [vmem:[%s2 + $0x50] sm:$0xff]
  %v244 = vld [vmem:[%s2 + $0x58] sm:$0xff]
  %v245 = vld [vmem:[%s2 + $0x60] sm:$0xff]
  %v246 = vld [vmem:[%s2 + $0x68] sm:$0xff]
  %v247 = vld [vmem:[%s2 + $0x70] sm:$0xff]
  %v248 = vld [vmem:[%s2 + $0x78] sm:$0xff]
  %v249 = vld [vmem:[%s2 + $0x80] sm:$0xff]
  %v250 = vld [vmem:[%s2 + $0x88] sm:$0xff]
  %v251 = vld [vmem:[%s2 + $0x90] sm:$0xff]
  %v252 = vld [vmem:[%s2 + $0x98] sm:$0xff]
  %v253 = vld [vmem:[%s2 + $0xa0] sm:$0xff]
  %v254 = vld [vmem:[%s2 + $0xa8] sm:$0xff]
  %v255 = vld [vmem:[%s2 + $0xb0] sm:$0xff]
  %v256 = vld [vmem:[%s2 + $0xb8] sm:$0xff]
  %v257 = vld [vmem:[%s2 + $0xc0] sm:$0xff]
  %v258 = vld [vmem:[%s2 + $0xc8] sm:$0xff]
  %v259 = vld [vmem:[%s2 + $0xd0] sm:$0xff]
  %v260 = vld [vmem:[%s2 + $0xd8] sm:$0xff]
  %v261 = vld [vmem:[%s2 + $0xe0] sm:$0xff]
  %v262 = vld [vmem:[%s2 + $0xe8] sm:$0xff]
  %v263 = vld [vmem:[%s2 + $0xf0] sm:$0xff]
  %v264 = vld [vmem:[%s2 + $0xf8] sm:$0xff]
  %v265 = vld [vmem:[%s2 + $0x100] sm:$0xff]
  %v266 = vld [vmem:[%s2 + $0x108] sm:$0xff]
  %v267 = vld [vmem:[%s2 + $0x110] sm:$0xff]
  %v268 = vld [vmem:[%s2 + $0x118] sm:$0xff]
  %v269 = vld [vmem:[%s2 + $0x120] sm:$0xff]
  %v270 = vld [vmem:[%s2 + $0x128] sm:$0xff]
  %v271 = vld [vmem:[%s2 + $0x130] sm:$0xff]
  %v272 = vld [vmem:[%s2 + $0x138] sm:$0xff]
  %v273 = vld [vmem:[%s2 + $0x140] sm:$0xff]
  %v274 = vld [vmem:[%s2 + $0x148] sm:$0xff]
  %v275 = vld [vmem:[%s2 + $0x150] sm:$0xff]
  %v276 = vld [vmem:[%s2 + $0x158] sm:$0xff]
  %v277 = vld [vmem:[%s2 + $0x160] sm:$0xff]
  %v278 = vld [vmem:[%s2 + $0x168] sm:$0xff]
  %v279 = vld [vmem:[%s2 + $0x170] sm:$0xff]
  %v280 = vld [vmem:[%s2 + $0x178] sm:$0xff]
  %v281 = vld [vmem:[%s2 + $0x180] sm:$0xff]
  %v282 = vld [vmem:[%s2 + $0x188] sm:$0xff]
  %v283 = vld [vmem:[%s2 + $0x190] sm:$0xff]
  %v284 = vld [vmem:[%s2 + $0x198] sm:$0xff]
  %v285 = vld [vmem:[%s2 + $0x1a0] sm:$0xff]
  %v286 = vld [vmem:[%s2 + $0x1a8] sm:$0xff]
  %v287 = vld [vmem:[%s2 + $0x1b0] sm:$0xff]
  %v288 = vld [vmem:[%s2 + $0x1b8] sm:$0xff]
  %v289 = vld [vmem:[%s2 + $0x1c0] sm:$0xff]
  %v290 = vld [vmem:[%s2 + $0x1c8] sm:$0xff]
  %v291 = vld [vmem:[%s2 + $0x1d0] sm:$0xff]
  %v292 = vld [vmem:[%s2 + $0x1d8] sm:$0xff]
  %v293 = vld [vmem:[%s2 + $0x1e0] sm:$0xff]
  %v294 = vld [vmem:[%s2 + $0x1e8] sm:$0xff]
  %v295 = vld [vmem:[%s2 + $0x1f0] sm:$0xff]
  %v296 = vld [vmem:[%s2 + $0x1f8] sm:$0xff]
  %v297 = vld [vmem:[%s2 + $0x200] sm:$0xff]
  %v298 = vld [vmem:[%s2 + $0x208] sm:$0xff]
  %v299 = vld [vmem:[%s2 + $0x210] sm:$0xff]
  %v300 = vld [vmem:[%s2 + $0x218] sm:$0xff]
  %v301 = vld [vmem:[%s2 + $0x220] sm:$0xff]
  %v302 = vld [vmem:[%s2 + $0x228] sm:$0xff]
  %v303 = vld [vmem:[%s2 + $0x230] sm:$0xff]
  %v304 = vld [vmem:[%s2 + $0x238] sm:$0xff]
  %v305 = vld [vmem:[%s2 + $0x240] sm:$0xff]
  %v306 = vld [vmem:[%s2 + $0x248] sm:$0xff]
  %v307 = vld [vmem:[%s2 + $0x250] sm:$0xff]
  %v308 = vld [vmem:[%s2 + $0x258] sm:$0xff]
  %v309 = vld [vmem:[%s2 + $0x260] sm:$0xff]
  %v310 = vld [vmem:[%s2 + $0x268] sm:$0xff]
  %v311 = vld [vmem:[%s2 + $0x270] sm:$0xff]
  %v312 = vld [vmem:[%s2 + $0x278] sm:$0xff]
  %v313 = vld [vmem:[%s2 + $0x280] sm:$0xff]
  %v314 = vld [vmem:[%s2 + $0x288] sm:$0xff]
  %v315 = vld [vmem:[%s2 + $0x290] sm:$0xff]
  %v316 = vld [vmem:[%s2 + $0x298] sm:$0xff]
  %v317 = vld [vmem:[%s2 + $0x2a0] sm:$0xff]
  %v318 = vld [vmem:[%s2 + $0x2a8] sm:$0xff]
  %v319 = vld [vmem:[%s2 + $0x2b0] sm:$0xff]
  %v320 = vld [vmem:[%s2 + $0x2b8] sm:$0xff]
  %v321 = vld [vmem:[%s2 + $0x2c0] sm:$0xff]
  %v322 = vld [vmem:[%s2 + $0x2c8] sm:$0xff]
  %v323 = vld [vmem:[%s2 + $0x2d0] sm:$0xff]
  %v324 = vld [vmem:[%s2 + $0x2d8] sm:$0xff]
  %v325 = vld [vmem:[%s2 + $0x2e0] sm:$0xff]
  %v326 = vld [vmem:[%s2 + $0x2e8] sm:$0xff]
  %v327 = vld [vmem:[%s2 + $0x2f0] sm:$0xff]
  %v328 = vld [vmem:[%s2 + $0x2f8] sm:$0xff]
  %v329 = vld [vmem:[%s2 + $0x300] sm:$0xff]
  %v330 = vld [vmem:[%s2 + $0x308] sm:$0xff]
  %v331 = vld [vmem:[%s2 + $0x310] sm:$0xff]
  %v332 = vld [vmem:[%s2 + $0x318] sm:$0xff]
  %v333 = vld [vmem:[%s2 + $0x320] sm:$0xff]
  %v334 = vld [vmem:[%s2 + $0x328] sm:$0xff]
  %v335 = vld [vmem:[%s2 + $0x330] sm:$0xff]
  %v336 = vld [vmem:[%s2 + $0x338] sm:$0xff]
  %v337 = vld [vmem:[%s2 + $0x340] sm:$0xff]
  %v338 = vld [vmem:[%s2 + $0x348] sm:$0xff]
  %v339 = vld [vmem:[%s2 + $0x350] sm:$0xff]
  %v340 = vld [vmem:[%s2 + $0x358] sm:$0xff]
  %342 = vset.pattern.permute.xlu0 0
  %343 = vperm.xlu0 %342, %v233
  %v344 = vpop.permute.xlu0 %343
  %347 = vset.pattern.permute.xlu0 0
  %348 = vperm.xlu0 %347, %v234
  %v349 = vpop.permute.xlu0 %348
  %352 = vset.pattern.permute.xlu0 0
  %353 = vperm.xlu0 %352, %v235
  %v354 = vpop.permute.xlu0 %353
  %357 = vset.pattern.permute.xlu0 0
  %358 = vperm.xlu0 %357, %v236
  %v359 = vpop.permute.xlu0 %358
  %362 = vset.pattern.permute.xlu0 0
  %363 = vperm.xlu0 %362, %v237
  %v364 = vpop.permute.xlu0 %363
  %367 = vset.pattern.permute.xlu0 0
  %368 = vperm.xlu0 %367, %v238
  %v369 = vpop.permute.xlu0 %368
  %372 = vset.pattern.permute.xlu0 0
  %373 = vperm.xlu0 %372, %v239
  %v374 = vpop.permute.xlu0 %373
  %377 = vset.pattern.permute.xlu0 0
  %378 = vperm.xlu0 %377, %v240
  %v379 = vpop.permute.xlu0 %378
  %382 = vset.pattern.permute.xlu0 0
  %383 = vperm.xlu0 %382, %v241
  %v384 = vpop.permute.xlu0 %383
  %387 = vset.pattern.permute.xlu0 0
  %388 = vperm.xlu0 %387, %v242
  %v389 = vpop.permute.xlu0 %388
  %392 = vset.pattern.permute.xlu0 0
  %393 = vperm.xlu0 %392, %v243
  %v394 = vpop.permute.xlu0 %393
  %397 = vset.pattern.permute.xlu0 0
  %398 = vperm.xlu0 %397, %v244
  %v399 = vpop.permute.xlu0 %398
  %402 = vset.pattern.permute.xlu0 0
  %403 = vperm.xlu0 %402, %v245
  %v404 = vpop.permute.xlu0 %403
  %407 = vset.pattern.permute.xlu0 0
  %408 = vperm.xlu0 %407, %v246
  %v409 = vpop.permute.xlu0 %408
  %412 = vset.pattern.permute.xlu0 0
  %413 = vperm.xlu0 %412, %v247
  %v414 = vpop.permute.xlu0 %413
  %417 = vset.pattern.permute.xlu0 0
  %418 = vperm.xlu0 %417, %v248
  %v419 = vpop.permute.xlu0 %418
  %422 = vset.pattern.permute.xlu0 0
  %423 = vperm.xlu0 %422, %v249
  %v424 = vpop.permute.xlu0 %423
  %427 = vset.pattern.permute.xlu0 0
  %428 = vperm.xlu0 %427, %v250
  %v429 = vpop.permute.xlu0 %428
  %432 = vset.pattern.permute.xlu0 0
  %433 = vperm.xlu0 %432, %v251
  %v434 = vpop.permute.xlu0 %433
  %437 = vset.pattern.permute.xlu0 0
  %438 = vperm.xlu0 %437, %v252
  %v439 = vpop.permute.xlu0 %438
  %442 = vset.pattern.permute.xlu0 0
  %443 = vperm.xlu0 %442, %v253
  %v444 = vpop.permute.xlu0 %443
  %447 = vset.pattern.permute.xlu0 0
  %448 = vperm.xlu0 %447, %v254
  %v449 = vpop.permute.xlu0 %448
  %452 = vset.pattern.permute.xlu0 0
  %453 = vperm.xlu0 %452, %v255
  %v454 = vpop.permute.xlu0 %453
  %457 = vset.pattern.permute.xlu0 0
  %458 = vperm.xlu0 %457, %v256
  %v459 = vpop.permute.xlu0 %458
  %462 = vset.pattern.permute.xlu0 0
  %463 = vperm.xlu0 %462, %v257
  %v464 = vpop.permute.xlu0 %463
  %467 = vset.pattern.permute.xlu0 0
  %468 = vperm.xlu0 %467, %v258
  %v469 = vpop.permute.xlu0 %468
  %472 = vset.pattern.permute.xlu0 0
  %473 = vperm.xlu0 %472, %v259
  %v474 = vpop.permute.xlu0 %473
  %477 = vset.pattern.permute.xlu0 0
  %478 = vperm.xlu0 %477, %v260
  %v479 = vpop.permute.xlu0 %478
  %482 = vset.pattern.permute.xlu0 0
  %483 = vperm.xlu0 %482, %v261
  %v484 = vpop.permute.xlu0 %483
  %487 = vset.pattern.permute.xlu0 0
  %488 = vperm.xlu0 %487, %v262
  %v489 = vpop.permute.xlu0 %488
  %492 = vset.pattern.permute.xlu0 0
  %493 = vperm.xlu0 %492, %v263
  %v494 = vpop.permute.xlu0 %493
  %497 = vset.pattern.permute.xlu0 0
  %498 = vperm.xlu0 %497, %v264
  %v499 = vpop.permute.xlu0 %498
  %502 = vset.pattern.permute.xlu0 0
  %503 = vperm.xlu0 %502, %v265
  %v504 = vpop.permute.xlu0 %503
  %507 = vset.pattern.permute.xlu0 0
  %508 = vperm.xlu0 %507, %v266
  %v509 = vpop.permute.xlu0 %508
  %512 = vset.pattern.permute.xlu0 0
  %513 = vperm.xlu0 %512, %v267
  %v514 = vpop.permute.xlu0 %513
  %517 = vset.pattern.permute.xlu0 0
  %518 = vperm.xlu0 %517, %v268
  %v519 = vpop.permute.xlu0 %518
  %522 = vset.pattern.permute.xlu0 0
  %523 = vperm.xlu0 %522, %v269
  %v524 = vpop.permute.xlu0 %523
  %527 = vset.pattern.permute.xlu0 0
  %528 = vperm.xlu0 %527, %v270
  %v529 = vpop.permute.xlu0 %528
  %532 = vset.pattern.permute.xlu0 0
  %533 = vperm.xlu0 %532, %v271
  %v534 = vpop.permute.xlu0 %533
  %537 = vset.pattern.permute.xlu0 0
  %538 = vperm.xlu0 %537, %v272
  %v539 = vpop.permute.xlu0 %538
  %542 = vset.pattern.permute.xlu0 0
  %543 = vperm.xlu0 %542, %v273
  %v544 = vpop.permute.xlu0 %543
  %547 = vset.pattern.permute.xlu0 0
  %548 = vperm.xlu0 %547, %v274
  %v549 = vpop.permute.xlu0 %548
  %552 = vset.pattern.permute.xlu0 0
  %553 = vperm.xlu0 %552, %v275
  %v554 = vpop.permute.xlu0 %553
  %557 = vset.pattern.permute.xlu0 0
  %558 = vperm.xlu0 %557, %v276
  %v559 = vpop.permute.xlu0 %558
  %562 = vset.pattern.permute.xlu0 0
  %563 = vperm.xlu0 %562, %v277
  %v564 = vpop.permute.xlu0 %563
  %567 = vset.pattern.permute.xlu0 0
  %568 = vperm.xlu0 %567, %v278
  %v569 = vpop.permute.xlu0 %568
  %572 = vset.pattern.permute.xlu0 0
  %573 = vperm.xlu0 %572, %v279
  %v574 = vpop.permute.xlu0 %573
  %577 = vset.pattern.permute.xlu0 0
  %578 = vperm.xlu0 %577, %v280
  %v579 = vpop.permute.xlu0 %578
  %582 = vset.pattern.permute.xlu0 0
  %583 = vperm.xlu0 %582, %v281
  %v584 = vpop.permute.xlu0 %583
  %587 = vset.pattern.permute.xlu0 0
  %588 = vperm.xlu0 %587, %v282
  %v589 = vpop.permute.xlu0 %588
  %592 = vset.pattern.permute.xlu0 0
  %593 = vperm.xlu0 %592, %v283
  %v594 = vpop.permute.xlu0 %593
  %597 = vset.pattern.permute.xlu0 0
  %598 = vperm.xlu0 %597, %v284
  %v599 = vpop.permute.xlu0 %598
  %602 = vset.pattern.permute.xlu0 0
  %603 = vperm.xlu0 %602, %v285
  %v604 = vpop.permute.xlu0 %603
  %607 = vset.pattern.permute.xlu0 0
  %608 = vperm.xlu0 %607, %v286
  %v609 = vpop.permute.xlu0 %608
  %612 = vset.pattern.permute.xlu0 0
  %613 = vperm.xlu0 %612, %v287
  %v614 = vpop.permute.xlu0 %613
  %617 = vset.pattern.permute.xlu0 0
  %618 = vperm.xlu0 %617, %v288
  %v619 = vpop.permute.xlu0 %618
  %622 = vset.pattern.permute.xlu0 0
  %623 = vperm.xlu0 %622, %v289
  %v624 = vpop.permute.xlu0 %623
  %627 = vset.pattern.permute.xlu0 0
  %628 = vperm.xlu0 %627, %v290
  %v629 = vpop.permute.xlu0 %628
  %632 = vset.pattern.permute.xlu0 0
  %633 = vperm.xlu0 %632, %v291
  %v634 = vpop.permute.xlu0 %633
  %637 = vset.pattern.permute.xlu0 0
  %638 = vperm.xlu0 %637, %v292
  %v639 = vpop.permute.xlu0 %638
  %642 = vset.pattern.permute.xlu0 0
  %643 = vperm.xlu0 %642, %v293
  %v644 = vpop.permute.xlu0 %643
  %647 = vset.pattern.permute.xlu0 0
  %648 = vperm.xlu0 %647, %v294
  %v649 = vpop.permute.xlu0 %648
  %652 = vset.pattern.permute.xlu0 0
  %653 = vperm.xlu0 %652, %v295
  %v654 = vpop.permute.xlu0 %653
  %657 = vset.pattern.permute.xlu0 0
  %658 = vperm.xlu0 %657, %v296
  %v659 = vpop.permute.xlu0 %658
  %662 = vset.pattern.permute.xlu0 0
  %663 = vperm.xlu0 %662, %v297
  %v664 = vpop.permute.xlu0 %663
  %667 = vset.pattern.permute.xlu0 0
  %668 = vperm.xlu0 %667, %v298
  %v669 = vpop.permute.xlu0 %668
  %672 = vset.pattern.permute.xlu0 0
  %673 = vperm.xlu0 %672, %v299
  %v674 = vpop.permute.xlu0 %673
  %677 = vset.pattern.permute.xlu0 0
  %678 = vperm.xlu0 %677, %v300
  %v679 = vpop.permute.xlu0 %678
  %682 = vset.pattern.permute.xlu0 0
  %683 = vperm.xlu0 %682, %v301
  %v684 = vpop.permute.xlu0 %683
  %687 = vset.pattern.permute.xlu0 0
  %688 = vperm.xlu0 %687, %v302
  %v689 = vpop.permute.xlu0 %688
  %692 = vset.pattern.permute.xlu0 0
  %693 = vperm.xlu0 %692, %v303
  %v694 = vpop.permute.xlu0 %693
  %697 = vset.pattern.permute.xlu0 0
  %698 = vperm.xlu0 %697, %v304
  %v699 = vpop.permute.xlu0 %698
  %702 = vset.pattern.permute.xlu0 0
  %703 = vperm.xlu0 %702, %v305
  %v704 = vpop.permute.xlu0 %703
  %707 = vset.pattern.permute.xlu0 0
  %708 = vperm.xlu0 %707, %v306
  %v709 = vpop.permute.xlu0 %708
  %712 = vset.pattern.permute.xlu0 0
  %713 = vperm.xlu0 %712, %v307
  %v714 = vpop.permute.xlu0 %713
  %717 = vset.pattern.permute.xlu0 0
  %718 = vperm.xlu0 %717, %v308
  %v719 = vpop.permute.xlu0 %718
  %722 = vset.pattern.permute.xlu0 0
  %723 = vperm.xlu0 %722, %v309
  %v724 = vpop.permute.xlu0 %723
  %727 = vset.pattern.permute.xlu0 0
  %728 = vperm.xlu0 %727, %v310
  %v729 = vpop.permute.xlu0 %728
  %732 = vset.pattern.permute.xlu0 0
  %733 = vperm.xlu0 %732, %v311
  %v734 = vpop.permute.xlu0 %733
  %737 = vset.pattern.permute.xlu0 0
  %738 = vperm.xlu0 %737, %v312
  %v739 = vpop.permute.xlu0 %738
  %742 = vset.pattern.permute.xlu0 0
  %743 = vperm.xlu0 %742, %v313
  %v744 = vpop.permute.xlu0 %743
  %747 = vset.pattern.permute.xlu0 0
  %748 = vperm.xlu0 %747, %v314
  %v749 = vpop.permute.xlu0 %748
  %752 = vset.pattern.permute.xlu0 0
  %753 = vperm.xlu0 %752, %v315
  %v754 = vpop.permute.xlu0 %753
  %757 = vset.pattern.permute.xlu0 0
  %758 = vperm.xlu0 %757, %v316
  %v759 = vpop.permute.xlu0 %758
  %762 = vset.pattern.permute.xlu0 0
  %763 = vperm.xlu0 %762, %v317
  %v764 = vpop.permute.xlu0 %763
  %767 = vset.pattern.permute.xlu0 0
  %768 = vperm.xlu0 %767, %v318
  %v769 = vpop.permute.xlu0 %768
  %772 = vset.pattern.permute.xlu0 0
  %773 = vperm.xlu0 %772, %v319
  %v774 = vpop.permute.xlu0 %773
  %777 = vset.pattern.permute.xlu0 0
  %778 = vperm.xlu0 %777, %v320
  %v779 = vpop.permute.xlu0 %778
  %782 = vset.pattern.permute.xlu0 0
  %783 = vperm.xlu0 %782, %v321
  %v784 = vpop.permute.xlu0 %783
  %787 = vset.pattern.permute.xlu0 0
  %788 = vperm.xlu0 %787, %v322
  %v789 = vpop.permute.xlu0 %788
  %792 = vset.pattern.permute.xlu0 0
  %793 = vperm.xlu0 %792, %v323
  %v794 = vpop.permute.xlu0 %793
  %797 = vset.pattern.permute.xlu0 0
  %798 = vperm.xlu0 %797, %v324
  %v799 = vpop.permute.xlu0 %798
  %802 = vset.pattern.permute.xlu0 0
  %803 = vperm.xlu0 %802, %v325
  %v804 = vpop.permute.xlu0 %803
  %807 = vset.pattern.permute.xlu0 0
  %808 = vperm.xlu0 %807, %v326
  %v809 = vpop.permute.xlu0 %808
  %812 = vset.pattern.permute.xlu0 0
  %813 = vperm.xlu0 %812, %v327
  %v814 = vpop.permute.xlu0 %813
  %817 = vset.pattern.permute.xlu0 0
  %818 = vperm.xlu0 %817, %v328
  %v819 = vpop.permute.xlu0 %818
  %822 = vset.pattern.permute.xlu0 0
  %823 = vperm.xlu0 %822, %v329
  %v824 = vpop.permute.xlu0 %823
  %827 = vset.pattern.permute.xlu0 0
  %828 = vperm.xlu0 %827, %v330
  %v829 = vpop.permute.xlu0 %828
  %832 = vset.pattern.permute.xlu0 0
  %833 = vperm.xlu0 %832, %v331
  %v834 = vpop.permute.xlu0 %833
  %837 = vset.pattern.permute.xlu0 0
  %838 = vperm.xlu0 %837, %v332
  %v839 = vpop.permute.xlu0 %838
  %842 = vset.pattern.permute.xlu0 0
  %843 = vperm.xlu0 %842, %v333
  %v844 = vpop.permute.xlu0 %843
  %847 = vset.pattern.permute.xlu0 0
  %848 = vperm.xlu0 %847, %v334
  %v849 = vpop.permute.xlu0 %848
  %852 = vset.pattern.permute.xlu0 0
  %853 = vperm.xlu0 %852, %v335
  %v854 = vpop.permute.xlu0 %853
  %857 = vset.pattern.permute.xlu0 0
  %858 = vperm.xlu0 %857, %v336
  %v859 = vpop.permute.xlu0 %858
  %862 = vset.pattern.permute.xlu0 0
  %863 = vperm.xlu0 %862, %v337
  %v864 = vpop.permute.xlu0 %863
  %867 = vset.pattern.permute.xlu0 0
  %868 = vperm.xlu0 %867, %v338
  %v869 = vpop.permute.xlu0 %868
  %872 = vset.pattern.permute.xlu0 0
  %873 = vperm.xlu0 %872, %v339
  %v874 = vpop.permute.xlu0 %873
  %877 = vset.pattern.permute.xlu0 0
  %878 = vperm.xlu0 %877, %v340
  %v879 = vpop.permute.xlu0 %878
  %v881 = vadd.f32 %v17, %v344
  %v882 = vadd.f32 %v18, %v344
  %v883 = vadd.f32 %v19, %v349
  %v884 = vadd.f32 %v20, %v349
  %v885 = vadd.f32 %v21, %v354
  %v886 = vadd.f32 %v22, %v354
  %v887 = vadd.f32 %v23, %v359
  %v888 = vadd.f32 %v24, %v359
  %v889 = vadd.f32 %v25, %v364
  %v890 = vadd.f32 %v26, %v364
  %v891 = vadd.f32 %v27, %v369
  %v892 = vadd.f32 %v28, %v369
  %v893 = vadd.f32 %v29, %v374
  %v894 = vadd.f32 %v30, %v374
  %v895 = vadd.f32 %v31, %v379
  %v896 = vadd.f32 %v32, %v379
  %v897 = vadd.f32 %v33, %v384
  %v898 = vadd.f32 %v34, %v384
  %v899 = vadd.f32 %v35, %v389
  %v900 = vadd.f32 %v36, %v389
  %v901 = vadd.f32 %v37, %v394
  %v902 = vadd.f32 %v38, %v394
  %v903 = vadd.f32 %v39, %v399
  %v904 = vadd.f32 %v40, %v399
  %v905 = vadd.f32 %v41, %v404
  %v906 = vadd.f32 %v42, %v404
  %v907 = vadd.f32 %v43, %v409
  %v908 = vadd.f32 %v44, %v409
  %v909 = vadd.f32 %v45, %v414
  %v910 = vadd.f32 %v46, %v414
  %v911 = vadd.f32 %v47, %v419
  %v912 = vadd.f32 %v48, %v419
  %v913 = vadd.f32 %v49, %v424
  %v914 = vadd.f32 %v50, %v424
  %v915 = vadd.f32 %v51, %v429
  %v916 = vadd.f32 %v52, %v429
  %v917 = vadd.f32 %v53, %v434
  %v918 = vadd.f32 %v54, %v434
  %v919 = vadd.f32 %v55, %v439
  %v920 = vadd.f32 %v56, %v439
  %v921 = vadd.f32 %v57, %v444
  %v922 = vadd.f32 %v58, %v444
  %v923 = vadd.f32 %v59, %v449
  %v924 = vadd.f32 %v60, %v449
  %v925 = vadd.f32 %v61, %v454
  %v926 = vadd.f32 %v62, %v454
  %v927 = vadd.f32 %v63, %v459
  %v928 = vadd.f32 %v64, %v459
  %v929 = vadd.f32 %v65, %v464
  %v930 = vadd.f32 %v66, %v464
  %v931 = vadd.f32 %v67, %v469
  %v932 = vadd.f32 %v68, %v469
  %v933 = vadd.f32 %v69, %v474
  %v934 = vadd.f32 %v70, %v474
  %v935 = vadd.f32 %v71, %v479
  %v936 = vadd.f32 %v72, %v479
  %v937 = vadd.f32 %v73, %v484
  %v938 = vadd.f32 %v74, %v484
  %v939 = vadd.f32 %v75, %v489
  %v940 = vadd.f32 %v76, %v489
  %v941 = vadd.f32 %v77, %v494
  %v942 = vadd.f32 %v78, %v494
  %v943 = vadd.f32 %v79, %v499
  %v944 = vadd.f32 %v80, %v499
  %v945 = vadd.f32 %v81, %v504
  %v946 = vadd.f32 %v82, %v504
  %v947 = vadd.f32 %v83, %v509
  %v948 = vadd.f32 %v84, %v509
  %v949 = vadd.f32 %v85, %v514
  %v950 = vadd.f32 %v86, %v514
  %v951 = vadd.f32 %v87, %v519
  %v952 = vadd.f32 %v88, %v519
  %v953 = vadd.f32 %v89, %v524
  %v954 = vadd.f32 %v90, %v524
  %v955 = vadd.f32 %v91, %v529
  %v956 = vadd.f32 %v92, %v529
  %v957 = vadd.f32 %v93, %v534
  %v958 = vadd.f32 %v94, %v534
  %v959 = vadd.f32 %v95, %v539
  %v960 = vadd.f32 %v96, %v539
  %v961 = vadd.f32 %v97, %v544
  %v962 = vadd.f32 %v98, %v544
  %v963 = vadd.f32 %v99, %v549
  %v964 = vadd.f32 %v100, %v549
  %v965 = vadd.f32 %v101, %v554
  %v966 = vadd.f32 %v102, %v554
  %v967 = vadd.f32 %v103, %v559
  %v968 = vadd.f32 %v104, %v559
  %v969 = vadd.f32 %v105, %v564
  %v970 = vadd.f32 %v106, %v564
  %v971 = vadd.f32 %v107, %v569
  %v972 = vadd.f32 %v108, %v569
  %v973 = vadd.f32 %v109, %v574
  %v974 = vadd.f32 %v110, %v574
  %v975 = vadd.f32 %v111, %v579
  %v976 = vadd.f32 %v112, %v579
  %v977 = vadd.f32 %v113, %v584
  %v978 = vadd.f32 %v114, %v584
  %v979 = vadd.f32 %v115, %v589
  %v980 = vadd.f32 %v116, %v589
  %v981 = vadd.f32 %v117, %v594
  %v982 = vadd.f32 %v118, %v594
  %v983 = vadd.f32 %v119, %v599
  %v984 = vadd.f32 %v120, %v599
  %v985 = vadd.f32 %v121, %v604
  %v986 = vadd.f32 %v122, %v604
  %v987 = vadd.f32 %v123, %v609
  %v988 = vadd.f32 %v124, %v609
  %v989 = vadd.f32 %v125, %v614
  %v990 = vadd.f32 %v126, %v614
  %v991 = vadd.f32 %v127, %v619
  %v992 = vadd.f32 %v128, %v619
  %v993 = vadd.f32 %v129, %v624
  %v994 = vadd.f32 %v130, %v624
  %v995 = vadd.f32 %v131, %v629
  %v996 = vadd.f32 %v132, %v629
  %v997 = vadd.f32 %v133, %v634
  %v998 = vadd.f32 %v134, %v634
  %v999 = vadd.f32 %v135, %v639
  %v1000 = vadd.f32 %v136, %v639
  %v1001 = vadd.f32 %v137, %v644
  %v1002 = vadd.f32 %v138, %v644
  %v1003 = vadd.f32 %v139, %v649
  %v1004 = vadd.f32 %v140, %v649
  %v1005 = vadd.f32 %v141, %v654
  %v1006 = vadd.f32 %v142, %v654
  %v1007 = vadd.f32 %v143, %v659
  %v1008 = vadd.f32 %v144, %v659
  %v1009 = vadd.f32 %v145, %v664
  %v1010 = vadd.f32 %v146, %v664
  %v1011 = vadd.f32 %v147, %v669
  %v1012 = vadd.f32 %v148, %v669
  %v1013 = vadd.f32 %v149, %v674
  %v1014 = vadd.f32 %v150, %v674
  %v1015 = vadd.f32 %v151, %v679
  %v1016 = vadd.f32 %v152, %v679
  %v1017 = vadd.f32 %v153, %v684
  %v1018 = vadd.f32 %v154, %v684
  %v1019 = vadd.f32 %v155, %v689
  %v1020 = vadd.f32 %v156, %v689
  %v1021 = vadd.f32 %v157, %v694
  %v1022 = vadd.f32 %v158, %v694
  %v1023 = vadd.f32 %v159, %v699
  %v1024 = vadd.f32 %v160, %v699
  %v1025 = vadd.f32 %v161, %v704
  %v1026 = vadd.f32 %v162, %v704
  %v1027 = vadd.f32 %v163, %v709
  %v1028 = vadd.f32 %v164, %v709
  %v1029 = vadd.f32 %v165, %v714
  %v1030 = vadd.f32 %v166, %v714
  %v1031 = vadd.f32 %v167, %v719
  %v1032 = vadd.f32 %v168, %v719
  %v1033 = vadd.f32 %v169, %v724
  %v1034 = vadd.f32 %v170, %v724
  %v1035 = vadd.f32 %v171, %v729
  %v1036 = vadd.f32 %v172, %v729
  %v1037 = vadd.f32 %v173, %v734
  %v1038 = vadd.f32 %v174, %v734
  %v1039 = vadd.f32 %v175, %v739
  %v1040 = vadd.f32 %v176, %v739
  %v1041 = vadd.f32 %v177, %v744
  %v1042 = vadd.f32 %v178, %v744
  %v1043 = vadd.f32 %v179, %v749
  %v1044 = vadd.f32 %v180, %v749
  %v1045 = vadd.f32 %v181, %v754
  %v1046 = vadd.f32 %v182, %v754
  %v1047 = vadd.f32 %v183, %v759
  %v1048 = vadd.f32 %v184, %v759
  %v1049 = vadd.f32 %v185, %v764
  %v1050 = vadd.f32 %v186, %v764
  %v1051 = vadd.f32 %v187, %v769
  %v1052 = vadd.f32 %v188, %v769
  %v1053 = vadd.f32 %v189, %v774
  %v1054 = vadd.f32 %v190, %v774
  %v1055 = vadd.f32 %v191, %v779
  %v1056 = vadd.f32 %v192, %v779
  %v1057 = vadd.f32 %v193, %v784
  %v1058 = vadd.f32 %v194, %v784
  %v1059 = vadd.f32 %v195, %v789
  %v1060 = vadd.f32 %v196, %v789
  %v1061 = vadd.f32 %v197, %v794
  %v1062 = vadd.f32 %v198, %v794
  %v1063 = vadd.f32 %v199, %v799
  %v1064 = vadd.f32 %v200, %v799
  %v1065 = vadd.f32 %v201, %v804
  %v1066 = vadd.f32 %v202, %v804
  %v1067 = vadd.f32 %v203, %v809
  %v1068 = vadd.f32 %v204, %v809
  %v1069 = vadd.f32 %v205, %v814
  %v1070 = vadd.f32 %v206, %v814
  %v1071 = vadd.f32 %v207, %v819
  %v1072 = vadd.f32 %v208, %v819
  %v1073 = vadd.f32 %v209, %v824
  %v1074 = vadd.f32 %v210, %v824
  %v1075 = vadd.f32 %v211, %v829
  %v1076 = vadd.f32 %v212, %v829
  %v1077 = vadd.f32 %v213, %v834
  %v1078 = vadd.f32 %v214, %v834
  %v1079 = vadd.f32 %v215, %v839
  %v1080 = vadd.f32 %v216, %v839
  %v1081 = vadd.f32 %v217, %v844
  %v1082 = vadd.f32 %v218, %v844
  %v1083 = vadd.f32 %v219, %v849
  %v1084 = vadd.f32 %v220, %v849
  %v1085 = vadd.f32 %v221, %v854
  %v1086 = vadd.f32 %v222, %v854
  %v1087 = vadd.f32 %v223, %v859
  %v1088 = vadd.f32 %v224, %v859
  %v1089 = vadd.f32 %v225, %v864
  %v1090 = vadd.f32 %v226, %v864
  %v1091 = vadd.f32 %v227, %v869
  %v1092 = vadd.f32 %v228, %v869
  %v1093 = vadd.f32 %v229, %v874
  %v1094 = vadd.f32 %v230, %v874
  %v1095 = vadd.f32 %v231, %v879
  %v1096 = vadd.f32 %v232, %v879
  %v1097 = vmax.f32 %v881, 0.0
  %v1098 = vmax.f32 %v882, 0.0
  %v1099 = vmax.f32 %v883, 0.0
  %v1100 = vmax.f32 %v884, 0.0
  %v1101 = vmax.f32 %v885, 0.0
  %v1102 = vmax.f32 %v886, 0.0
  %v1103 = vmax.f32 %v887, 0.0
  %v1104 = vmax.f32 %v888, 0.0
  %v1105 = vmax.f32 %v889, 0.0
  %v1106 = vmax.f32 %v890, 0.0
  %v1107 = vmax.f32 %v891, 0.0
  %v1108 = vmax.f32 %v892, 0.0
  %v1109 = vmax.f32 %v893, 0.0
  %v1110 = vmax.f32 %v894, 0.0
  %v1111 = vmax.f32 %v895, 0.0
  %v1112 = vmax.f32 %v896, 0.0
  %v1113 = vmax.f32 %v897, 0.0
  %v1114 = vmax.f32 %v898, 0.0
  %v1115 = vmax.f32 %v899, 0.0
  %v1116 = vmax.f32 %v900, 0.0
  %v1117 = vmax.f32 %v901, 0.0
  %v1118 = vmax.f32 %v902, 0.0
  %v1119 = vmax.f32 %v903, 0.0
  %v1120 = vmax.f32 %v904, 0.0
  %v1121 = vmax.f32 %v905, 0.0
  %v1122 = vmax.f32 %v906, 0.0
  %v1123 = vmax.f32 %v907, 0.0
  %v1124 = vmax.f32 %v908, 0.0
  %v1125 = vmax.f32 %v909, 0.0
  %v1126 = vmax.f32 %v910, 0.0
  %v1127 = vmax.f32 %v911, 0.0
  %v1128 = vmax.f32 %v912, 0.0
  %v1129 = vmax.f32 %v913, 0.0
  %v1130 = vmax.f32 %v914, 0.0
  %v1131 = vmax.f32 %v915, 0.0
  %v1132 = vmax.f32 %v916, 0.0
  %v1133 = vmax.f32 %v917, 0.0
  %v1134 = vmax.f32 %v918, 0.0
  %v1135 = vmax.f32 %v919, 0.0
  %v1136 = vmax.f32 %v920, 0.0
  %v1137 = vmax.f32 %v921, 0.0
  %v1138 = vmax.f32 %v922, 0.0
  %v1139 = vmax.f32 %v923, 0.0
  %v1140 = vmax.f32 %v924, 0.0
  %v1141 = vmax.f32 %v925, 0.0
  %v1142 = vmax.f32 %v926, 0.0
  %v1143 = vmax.f32 %v927, 0.0
  %v1144 = vmax.f32 %v928, 0.0
  %v1145 = vmax.f32 %v929, 0.0
  %v1146 = vmax.f32 %v930, 0.0
  %v1147 = vmax.f32 %v931, 0.0
  %v1148 = vmax.f32 %v932, 0.0
  %v1149 = vmax.f32 %v933, 0.0
  %v1150 = vmax.f32 %v934, 0.0
  %v1151 = vmax.f32 %v935, 0.0
  %v1152 = vmax.f32 %v936, 0.0
  %v1153 = vmax.f32 %v937, 0.0
  %v1154 = vmax.f32 %v938, 0.0
  %v1155 = vmax.f32 %v939, 0.0
  %v1156 = vmax.f32 %v940, 0.0
  %v1157 = vmax.f32 %v941, 0.0
  %v1158 = vmax.f32 %v942, 0.0
  %v1159 = vmax.f32 %v943, 0.0
  %v1160 = vmax.f32 %v944, 0.0
  %v1161 = vmax.f32 %v945, 0.0
  %v1162 = vmax.f32 %v946, 0.0
  %v1163 = vmax.f32 %v947, 0.0
  %v1164 = vmax.f32 %v948, 0.0
  %v1165 = vmax.f32 %v949, 0.0
  %v1166 = vmax.f32 %v950, 0.0
  %v1167 = vmax.f32 %v951, 0.0
  %v1168 = vmax.f32 %v952, 0.0
  %v1169 = vmax.f32 %v953, 0.0
  %v1170 = vmax.f32 %v954, 0.0
  %v1171 = vmax.f32 %v955, 0.0
  %v1172 = vmax.f32 %v956, 0.0
  %v1173 = vmax.f32 %v957, 0.0
  %v1174 = vmax.f32 %v958, 0.0
  %v1175 = vmax.f32 %v959, 0.0
  %v1176 = vmax.f32 %v960, 0.0
  %v1177 = vmax.f32 %v961, 0.0
  %v1178 = vmax.f32 %v962, 0.0
  %v1179 = vmax.f32 %v963, 0.0
  %v1180 = vmax.f32 %v964, 0.0
  %v1181 = vmax.f32 %v965, 0.0
  %v1182 = vmax.f32 %v966, 0.0
  %v1183 = vmax.f32 %v967, 0.0
  %v1184 = vmax.f32 %v968, 0.0
  %v1185 = vmax.f32 %v969, 0.0
  %v1186 = vmax.f32 %v970, 0.0
  %v1187 = vmax.f32 %v971, 0.0
  %v1188 = vmax.f32 %v972, 0.0
  %v1189 = vmax.f32 %v973, 0.0
  %v1190 = vmax.f32 %v974, 0.0
  %v1191 = vmax.f32 %v975, 0.0
  %v1192 = vmax.f32 %v976, 0.0
  %v1193 = vmax.f32 %v977, 0.0
  %v1194 = vmax.f32 %v978, 0.0
  %v1195 = vmax.f32 %v979, 0.0
  %v1196 = vmax.f32 %v980, 0.0
  %v1197 = vmax.f32 %v981, 0.0
  %v1198 = vmax.f32 %v982, 0.0
  %v1199 = vmax.f32 %v983, 0.0
  %v1200 = vmax.f32 %v984, 0.0
  %v1201 = vmax.f32 %v985, 0.0
  %v1202 = vmax.f32 %v986, 0.0
  %v1203 = vmax.f32 %v987, 0.0
  %v1204 = vmax.f32 %v988, 0.0
  %v1205 = vmax.f32 %v989, 0.0
  %v1206 = vmax.f32 %v990, 0.0
  %v1207 = vmax.f32 %v991, 0.0
  %v1208 = vmax.f32 %v992, 0.0
  %v1209 = vmax.f32 %v993, 0.0
  %v1210 = vmax.f32 %v994, 0.0
  %v1211 = vmax.f32 %v995, 0.0
  %v1212 = vmax.f32 %v996, 0.0
  %v1213 = vmax.f32 %v997, 0.0
  %v1214 = vmax.f32 %v998, 0.0
  %v1215 = vmax.f32 %v999, 0.0
  %v1216 = vmax.f32 %v1000, 0.0
  %v1217 = vmax.f32 %v1001, 0.0
  %v1218 = vmax.f32 %v1002, 0.0
  %v1219 = vmax.f32 %v1003, 0.0
  %v1220 = vmax.f32 %v1004, 0.0
  %v1221 = vmax.f32 %v1005, 0.0
  %v1222 = vmax.f32 %v1006, 0.0
  %v1223 = vmax.f32 %v1007, 0.0
  %v1224 = vmax.f32 %v1008, 0.0
  %v1225 = vmax.f32 %v1009, 0.0
  %v1226 = vmax.f32 %v1010, 0.0
  %v1227 = vmax.f32 %v1011, 0.0
  %v1228 = vmax.f32 %v1012, 0.0
  %v1229 = vmax.f32 %v1013, 0.0
  %v1230 = vmax.f32 %v1014, 0.0
  %v1231 = vmax.f32 %v1015, 0.0
  %v1232 = vmax.f32 %v1016, 0.0
  %v1233 = vmax.f32 %v1017, 0.0
  %v1234 = vmax.f32 %v1018, 0.0
  %v1235 = vmax.f32 %v1019, 0.0
  %v1236 = vmax.f32 %v1020, 0.0
  %v1237 = vmax.f32 %v1021, 0.0
  %v1238 = vmax.f32 %v1022, 0.0
  %v1239 = vmax.f32 %v1023, 0.0
  %v1240 = vmax.f32 %v1024, 0.0
  %v1241 = vmax.f32 %v1025, 0.0
  %v1242 = vmax.f32 %v1026, 0.0
  %v1243 = vmax.f32 %v1027, 0.0
  %v1244 = vmax.f32 %v1028, 0.0
  %v1245 = vmax.f32 %v1029, 0.0
  %v1246 = vmax.f32 %v1030, 0.0
  %v1247 = vmax.f32 %v1031, 0.0
  %v1248 = vmax.f32 %v1032, 0.0
  %v1249 = vmax.f32 %v1033, 0.0
  %v1250 = vmax.f32 %v1034, 0.0
  %v1251 = vmax.f32 %v1035, 0.0
  %v1252 = vmax.f32 %v1036, 0.0
  %v1253 = vmax.f32 %v1037, 0.0
  %v1254 = vmax.f32 %v1038, 0.0
  %v1255 = vmax.f32 %v1039, 0.0
  %v1256 = vmax.f32 %v1040, 0.0
  %v1257 = vmax.f32 %v1041, 0.0
  %v1258 = vmax.f32 %v1042, 0.0
  %v1259 = vmax.f32 %v1043, 0.0
  %v1260 = vmax.f32 %v1044, 0.0
  %v1261 = vmax.f32 %v1045, 0.0
  %v1262 = vmax.f32 %v1046, 0.0
  %v1263 = vmax.f32 %v1047, 0.0
  %v1264 = vmax.f32 %v1048, 0.0
  %v1265 = vmax.f32 %v1049, 0.0
  %v1266 = vmax.f32 %v1050, 0.0
  %v1267 = vmax.f32 %v1051, 0.0
  %v1268 = vmax.f32 %v1052, 0.0
  %v1269 = vmax.f32 %v1053, 0.0
  %v1270 = vmax.f32 %v1054, 0.0
  %v1271 = vmax.f32 %v1055, 0.0
  %v1272 = vmax.f32 %v1056, 0.0
  %v1273 = vmax.f32 %v1057, 0.0
  %v1274 = vmax.f32 %v1058, 0.0
  %v1275 = vmax.f32 %v1059, 0.0
  %v1276 = vmax.f32 %v1060, 0.0
  %v1277 = vmax.f32 %v1061, 0.0
  %v1278 = vmax.f32 %v1062, 0.0
  %v1279 = vmax.f32 %v1063, 0.0
  %v1280 = vmax.f32 %v1064, 0.0
  %v1281 = vmax.f32 %v1065, 0.0
  %v1282 = vmax.f32 %v1066, 0.0
  %v1283 = vmax.f32 %v1067, 0.0
  %v1284 = vmax.f32 %v1068, 0.0
  %v1285 = vmax.f32 %v1069, 0.0
  %v1286 = vmax.f32 %v1070, 0.0
  %v1287 = vmax.f32 %v1071, 0.0
  %v1288 = vmax.f32 %v1072, 0.0
  %v1289 = vmax.f32 %v1073, 0.0
  %v1290 = vmax.f32 %v1074, 0.0
  %v1291 = vmax.f32 %v1075, 0.0
  %v1292 = vmax.f32 %v1076, 0.0
  %v1293 = vmax.f32 %v1077, 0.0
  %v1294 = vmax.f32 %v1078, 0.0
  %v1295 = vmax.f32 %v1079, 0.0
  %v1296 = vmax.f32 %v1080, 0.0
  %v1297 = vmax.f32 %v1081, 0.0
  %v1298 = vmax.f32 %v1082, 0.0
  %v1299 = vmax.f32 %v1083, 0.0
  %v1300 = vmax.f32 %v1084, 0.0
  %v1301 = vmax.f32 %v1085, 0.0
  %v1302 = vmax.f32 %v1086, 0.0
  %v1303 = vmax.f32 %v1087, 0.0
  %v1304 = vmax.f32 %v1088, 0.0
  %v1305 = vmax.f32 %v1089, 0.0
  %v1306 = vmax.f32 %v1090, 0.0
  %v1307 = vmax.f32 %v1091, 0.0
  %v1308 = vmax.f32 %v1092, 0.0
  %v1309 = vmax.f32 %v1093, 0.0
  %v1310 = vmax.f32 %v1094, 0.0
  %v1311 = vmax.f32 %v1095, 0.0
  %v1312 = vmax.f32 %v1096, 0.0
  %v1313 = vld [vmem:[%s1] sm:$0xff]
  %v1314 = vld [vmem:[%s1 + $0x8] sm:$0xff]
  %v1315 = vld [vmem:[%s1 + $0x10] sm:$0xff]
  %v1316 = vld [vmem:[%s1 + $0x18] sm:$0xf]
  %v1317 = vld [vmem:[%s1 + $0x1c] sm:$0xff]
  %v1318 = vld [vmem:[%s1 + $0x24] sm:$0xff]
  %v1319 = vld [vmem:[%s1 + $0x2c] sm:$0xff]
  %v1320 = vld [vmem:[%s1 + $0x34] sm:$0xf]
  %v1321 = vld [vmem:[%s1 + $0x38] sm:$0xff]
  %v1322 = vld [vmem:[%s1 + $0x40] sm:$0xff]
  %v1323 = vld [vmem:[%s1 + $0x48] sm:$0xff]
  %v1324 = vld [vmem:[%s1 + $0x50] sm:$0xf]
  %v1325 = vld [vmem:[%s1 + $0x54] sm:$0xff]
  %v1326 = vld [vmem:[%s1 + $0x5c] sm:$0xff]
  %v1327 = vld [vmem:[%s1 + $0x64] sm:$0xff]
  %v1328 = vld [vmem:[%s1 + $0x6c] sm:$0xf]
  %v1329 = vld [vmem:[%s1 + $0x70] sm:$0xff]
  %v1330 = vld [vmem:[%s1 + $0x78] sm:$0xff]
  %v1331 = vld [vmem:[%s1 + $0x80] sm:$0xff]
  %v1332 = vld [vmem:[%s1 + $0x88] sm:$0xf]
  %v1333 = vld [vmem:[%s1 + $0x8c] sm:$0xff]
  %v1334 = vld [vmem:[%s1 + $0x94] sm:$0xff]
  %v1335 = vld [vmem:[%s1 + $0x9c] sm:$0xff]
  %v1336 = vld [vmem:[%s1 + $0xa4] sm:$0xf]
  %v1337 = vld [vmem:[%s1 + $0xa8] sm:$0xff]
  %v1338 = vld [vmem:[%s1 + $0xb0] sm:$0xff]
  %v1339 = vld [vmem:[%s1 + $0xb8] sm:$0xff]
  %v1340 = vld [vmem:[%s1 + $0xc0] sm:$0xf]
  %v1341 = vld [vmem:[%s1 + $0xc4] sm:$0xff]
  %v1342 = vld [vmem:[%s1 + $0xcc] sm:$0xff]
  %v1343 = vld [vmem:[%s1 + $0xd4] sm:$0xff]
  %v1344 = vld [vmem:[%s1 + $0xdc] sm:$0xf]
  %v1345 = vld [vmem:[%s1 + $0xe0] sm:$0xff]
  %v1346 = vld [vmem:[%s1 + $0xe8] sm:$0xff]
  %v1347 = vld [vmem:[%s1 + $0xf0] sm:$0xff]
  %v1348 = vld [vmem:[%s1 + $0xf8] sm:$0xf]
  %v1349 = vld [vmem:[%s1 + $0xfc] sm:$0xff]
  %v1350 = vld [vmem:[%s1 + $0x104] sm:$0xff]
  %v1351 = vld [vmem:[%s1 + $0x10c] sm:$0xff]
  %v1352 = vld [vmem:[%s1 + $0x114] sm:$0xf]
  %v1353 = vld [vmem:[%s1 + $0x118] sm:$0xff]
  %v1354 = vld [vmem:[%s1 + $0x120] sm:$0xff]
  %v1355 = vld [vmem:[%s1 + $0x128] sm:$0xff]
  %v1356 = vld [vmem:[%s1 + $0x130] sm:$0xf]
  %v1357 = vld [vmem:[%s1 + $0x134] sm:$0xff]
  %v1358 = vld [vmem:[%s1 + $0x13c] sm:$0xff]
  %v1359 = vld [vmem:[%s1 + $0x144] sm:$0xff]
  %v1360 = vld [vmem:[%s1 + $0x14c] sm:$0xf]
  %v1361 = vld [vmem:[%s1 + $0x150] sm:$0xff]
  %v1362 = vld [vmem:[%s1 + $0x158] sm:$0xff]
  %v1363 = vld [vmem:[%s1 + $0x160] sm:$0xff]
  %v1364 = vld [vmem:[%s1 + $0x168] sm:$0xf]
  %v1365 = vld [vmem:[%s1 + $0x16c] sm:$0xff]
  %v1366 = vld [vmem:[%s1 + $0x174] sm:$0xff]
  %v1367 = vld [vmem:[%s1 + $0x17c] sm:$0xff]
  %v1368 = vld [vmem:[%s1 + $0x184] sm:$0xf]
  %v1369 = vld [vmem:[%s1 + $0x188] sm:$0xff]
  %v1370 = vld [vmem:[%s1 + $0x190] sm:$0xff]
  %v1371 = vld [vmem:[%s1 + $0x198] sm:$0xff]
  %v1372 = vld [vmem:[%s1 + $0x1a0] sm:$0xf]
  %v1373 = vld [vmem:[%s1 + $0x1a4] sm:$0xff]
  %v1374 = vld [vmem:[%s1 + $0x1ac] sm:$0xff]
  %v1375 = vld [vmem:[%s1 + $0x1b4] sm:$0xff]
  %v1376 = vld [vmem:[%s1 + $0x1bc] sm:$0xf]
  %v1377 = vld [vmem:[%s1 + $0x1c0] sm:$0xff]
  %v1378 = vld [vmem:[%s1 + $0x1c8] sm:$0xff]
  %v1379 = vld [vmem:[%s1 + $0x1d0] sm:$0xff]
  %v1380 = vld [vmem:[%s1 + $0x1d8] sm:$0xf]
  %v1381 = vld [vmem:[%s1 + $0x1dc] sm:$0xff]
  %v1382 = vld [vmem:[%s1 + $0x1e4] sm:$0xff]
  %v1383 = vld [vmem:[%s1 + $0x1ec] sm:$0xff]
  %v1384 = vld [vmem:[%s1 + $0x1f4] sm:$0xf]
  %v1385 = vld [vmem:[%s1 + $0x1f8] sm:$0xff]
  %v1386 = vld [vmem:[%s1 + $0x200] sm:$0xff]
  %v1387 = vld [vmem:[%s1 + $0x208] sm:$0xff]
  %v1388 = vld [vmem:[%s1 + $0x210] sm:$0xf]
  %v1389 = vld [vmem:[%s1 + $0x214] sm:$0xff]
  %v1390 = vld [vmem:[%s1 + $0x21c] sm:$0xff]
  %v1391 = vld [vmem:[%s1 + $0x224] sm:$0xff]
  %v1392 = vld [vmem:[%s1 + $0x22c] sm:$0xf]
  %v1393 = vld [vmem:[%s1 + $0x230] sm:$0xff]
  %v1394 = vld [vmem:[%s1 + $0x238] sm:$0xff]
  %v1395 = vld [vmem:[%s1 + $0x240] sm:$0xff]
  %v1396 = vld [vmem:[%s1 + $0x248] sm:$0xf]
  %v1397 = vld [vmem:[%s1 + $0x24c] sm:$0xff]
  %v1398 = vld [vmem:[%s1 + $0x254] sm:$0xff]
  %v1399 = vld [vmem:[%s1 + $0x25c] sm:$0xff]
  %v1400 = vld [vmem:[%s1 + $0x264] sm:$0xf]
  %v1401 = vld [vmem:[%s1 + $0x268] sm:$0xff]
  %v1402 = vld [vmem:[%s1 + $0x270] sm:$0xff]
  %v1403 = vld [vmem:[%s1 + $0x278] sm:$0xff]
  %v1404 = vld [vmem:[%s1 + $0x280] sm:$0xf]
  %v1405 = vld [vmem:[%s1 + $0x284] sm:$0xff]
  %v1406 = vld [vmem:[%s1 + $0x28c] sm:$0xff]
  %v1407 = vld [vmem:[%s1 + $0x294] sm:$0xff]
  %v1408 = vld [vmem:[%s1 + $0x29c] sm:$0xf]
  %v1409 = vunpack.c.l.bf16 %v1313
  %v1410 = vunpack.c.h.bf16 %v1313
  %v1411 = vunpack.c.l.bf16 %v1314
  %v1412 = vunpack.c.h.bf16 %v1314
  %v1413 = vunpack.c.l.bf16 %v1315
  %v1414 = vunpack.c.h.bf16 %v1315
  %v1415 = vunpack.c.l.bf16 %v1316
  %v1416 = vunpack.c.l.bf16 %v1317
  %v1417 = vunpack.c.h.bf16 %v1317
  %v1418 = vunpack.c.l.bf16 %v1318
  %v1419 = vunpack.c.h.bf16 %v1318
  %v1420 = vunpack.c.l.bf16 %v1319
  %v1421 = vunpack.c.h.bf16 %v1319
  %v1422 = vunpack.c.l.bf16 %v1320
  %v1423 = vunpack.c.l.bf16 %v1321
  %v1424 = vunpack.c.h.bf16 %v1321
  %v1425 = vunpack.c.l.bf16 %v1322
  %v1426 = vunpack.c.h.bf16 %v1322
  %v1427 = vunpack.c.l.bf16 %v1323
  %v1428 = vunpack.c.h.bf16 %v1323
  %v1429 = vunpack.c.l.bf16 %v1324
  %v1430 = vunpack.c.l.bf16 %v1325
  %v1431 = vunpack.c.h.bf16 %v1325
  %v1432 = vunpack.c.l.bf16 %v1326
  %v1433 = vunpack.c.h.bf16 %v1326
  %v1434 = vunpack.c.l.bf16 %v1327
  %v1435 = vunpack.c.h.bf16 %v1327
  %v1436 = vunpack.c.l.bf16 %v1328
  %v1437 = vunpack.c.l.bf16 %v1329
  %v1438 = vunpack.c.h.bf16 %v1329
  %v1439 = vunpack.c.l.bf16 %v1330
  %v1440 = vunpack.c.h.bf16 %v1330
  %v1441 = vunpack.c.l.bf16 %v1331
  %v1442 = vunpack.c.h.bf16 %v1331
  %v1443 = vunpack.c.l.bf16 %v1332
  %v1444 = vunpack.c.l.bf16 %v1333
  %v1445 = vunpack.c.h.bf16 %v1333
  %v1446 = vunpack.c.l.bf16 %v1334
  %v1447 = vunpack.c.h.bf16 %v1334
  %v1448 = vunpack.c.l.bf16 %v1335
  %v1449 = vunpack.c.h.bf16 %v1335
  %v1450 = vunpack.c.l.bf16 %v1336
  %v1451 = vunpack.c.l.bf16 %v1337
  %v1452 = vunpack.c.h.bf16 %v1337
  %v1453 = vunpack.c.l.bf16 %v1338
  %v1454 = vunpack.c.h.bf16 %v1338
  %v1455 = vunpack.c.l.bf16 %v1339
  %v1456 = vunpack.c.h.bf16 %v1339
  %v1457 = vunpack.c.l.bf16 %v1340
  %v1458 = vunpack.c.l.bf16 %v1341
  %v1459 = vunpack.c.h.bf16 %v1341
  %v1460 = vunpack.c.l.bf16 %v1342
  %v1461 = vunpack.c.h.bf16 %v1342
  %v1462 = vunpack.c.l.bf16 %v1343
  %v1463 = vunpack.c.h.bf16 %v1343
  %v1464 = vunpack.c.l.bf16 %v1344
  %v1465 = vunpack.c.l.bf16 %v1345
  %v1466 = vunpack.c.h.bf16 %v1345
  %v1467 = vunpack.c.l.bf16 %v1346
  %v1468 = vunpack.c.h.bf16 %v1346
  %v1469 = vunpack.c.l.bf16 %v1347
  %v1470 = vunpack.c.h.bf16 %v1347
  %v1471 = vunpack.c.l.bf16 %v1348
  %v1472 = vunpack.c.l.bf16 %v1349
  %v1473 = vunpack.c.h.bf16 %v1349
  %v1474 = vunpack.c.l.bf16 %v1350
  %v1475 = vunpack.c.h.bf16 %v1350
  %v1476 = vunpack.c.l.bf16 %v1351
  %v1477 = vunpack.c.h.bf16 %v1351
  %v1478 = vunpack.c.l.bf16 %v1352
  %v1479 = vunpack.c.l.bf16 %v1353
  %v1480 = vunpack.c.h.bf16 %v1353
  %v1481 = vunpack.c.l.bf16 %v1354
  %v1482 = vunpack.c.h.bf16 %v1354
  %v1483 = vunpack.c.l.bf16 %v1355
  %v1484 = vunpack.c.h.bf16 %v1355
  %v1485 = vunpack.c.l.bf16 %v1356
  %v1486 = vunpack.c.l.bf16 %v1357
  %v1487 = vunpack.c.h.bf16 %v1357
  %v1488 = vunpack.c.l.bf16 %v1358
  %v1489 = vunpack.c.h.bf16 %v1358
  %v1490 = vunpack.c.l.bf16 %v1359
  %v1491 = vunpack.c.h.bf16 %v1359
  %v1492 = vunpack.c.l.bf16 %v1360
  %v1493 = vunpack.c.l.bf16 %v1361
  %v1494 = vunpack.c.h.bf16 %v1361
  %v1495 = vunpack.c.l.bf16 %v1362
  %v1496 = vunpack.c.h.bf16 %v1362
  %v1497 = vunpack.c.l.bf16 %v1363
  %v1498 = vunpack.c.h.bf16 %v1363
  %v1499 = vunpack.c.l.bf16 %v1364
  %v1500 = vunpack.c.l.bf16 %v1365
  %v1501 = vunpack.c.h.bf16 %v1365
  %v1502 = vunpack.c.l.bf16 %v1366
  %v1503 = vunpack.c.h.bf16 %v1366
  %v1504 = vunpack.c.l.bf16 %v1367
  %v1505 = vunpack.c.h.bf16 %v1367
  %v1506 = vunpack.c.l.bf16 %v1368
  %v1507 = vunpack.c.l.bf16 %v1369
  %v1508 = vunpack.c.h.bf16 %v1369
  %v1509 = vunpack.c.l.bf16 %v1370
  %v1510 = vunpack.c.h.bf16 %v1370
  %v1511 = vunpack.c.l.bf16 %v1371
  %v1512 = vunpack.c.h.bf16 %v1371
  %v1513 = vunpack.c.l.bf16 %v1372
  %v1514 = vunpack.c.l.bf16 %v1373
  %v1515 = vunpack.c.h.bf16 %v1373
  %v1516 = vunpack.c.l.bf16 %v1374
  %v1517 = vunpack.c.h.bf16 %v1374
  %v1518 = vunpack.c.l.bf16 %v1375
  %v1519 = vunpack.c.h.bf16 %v1375
  %v1520 = vunpack.c.l.bf16 %v1376
  %v1521 = vunpack.c.l.bf16 %v1377
  %v1522 = vunpack.c.h.bf16 %v1377
  %v1523 = vunpack.c.l.bf16 %v1378
  %v1524 = vunpack.c.h.bf16 %v1378
  %v1525 = vunpack.c.l.bf16 %v1379
  %v1526 = vunpack.c.h.bf16 %v1379
  %v1527 = vunpack.c.l.bf16 %v1380
  %v1528 = vunpack.c.l.bf16 %v1381
  %v1529 = vunpack.c.h.bf16 %v1381
  %v1530 = vunpack.c.l.bf16 %v1382
  %v1531 = vunpack.c.h.bf16 %v1382
  %v1532 = vunpack.c.l.bf16 %v1383
  %v1533 = vunpack.c.h.bf16 %v1383
  %v1534 = vunpack.c.l.bf16 %v1384
  %v1535 = vunpack.c.l.bf16 %v1385
  %v1536 = vunpack.c.h.bf16 %v1385
  %v1537 = vunpack.c.l.bf16 %v1386
  %v1538 = vunpack.c.h.bf16 %v1386
  %v1539 = vunpack.c.l.bf16 %v1387
  %v1540 = vunpack.c.h.bf16 %v1387
  %v1541 = vunpack.c.l.bf16 %v1388
  %v1542 = vunpack.c.l.bf16 %v1389
  %v1543 = vunpack.c.h.bf16 %v1389
  %v1544 = vunpack.c.l.bf16 %v1390
  %v1545 = vunpack.c.h.bf16 %v1390
  %v1546 = vunpack.c.l.bf16 %v1391
  %v1547 = vunpack.c.h.bf16 %v1391
  %v1548 = vunpack.c.l.bf16 %v1392
  %v1549 = vunpack.c.l.bf16 %v1393
  %v1550 = vunpack.c.h.bf16 %v1393
  %v1551 = vunpack.c.l.bf16 %v1394
  %v1552 = vunpack.c.h.bf16 %v1394
  %v1553 = vunpack.c.l.bf16 %v1395
  %v1554 = vunpack.c.h.bf16 %v1395
  %v1555 = vunpack.c.l.bf16 %v1396
  %v1556 = vunpack.c.l.bf16 %v1397
  %v1557 = vunpack.c.h.bf16 %v1397
  %v1558 = vunpack.c.l.bf16 %v1398
  %v1559 = vunpack.c.h.bf16 %v1398
  %v1560 = vunpack.c.l.bf16 %v1399
  %v1561 = vunpack.c.h.bf16 %v1399
  %v1562 = vunpack.c.l.bf16 %v1400
  %v1563 = vunpack.c.l.bf16 %v1401
  %v1564 = vunpack.c.h.bf16 %v1401
  %v1565 = vunpack.c.l.bf16 %v1402
  %v1566 = vunpack.c.h.bf16 %v1402
  %v1567 = vunpack.c.l.bf16 %v1403
  %v1568 = vunpack.c.h.bf16 %v1403
  %v1569 = vunpack.c.l.bf16 %v1404
  %v1570 = vunpack.c.l.bf16 %v1405
  %v1571 = vunpack.c.h.bf16 %v1405
  %v1572 = vunpack.c.l.bf16 %v1406
  %v1573 = vunpack.c.h.bf16 %v1406
  %v1574 = vunpack.c.l.bf16 %v1407
  %v1575 = vunpack.c.h.bf16 %v1407
  %v1576 = vunpack.c.l.bf16 %v1408
  %v1577 = vld [vmem:[%s3] sm:$0xff]
  %v1578 = vld [vmem:[%s3 + $0x8] sm:$0xff]
  %v1579 = vld [vmem:[%s3 + $0x10] sm:$0xff]
  %v1580 = vld [vmem:[%s3 + $0x18] sm:$0xff]
  %v1581 = vld [vmem:[%s3 + $0x20] sm:$0xff]
  %v1582 = vld [vmem:[%s3 + $0x28] sm:$0xff]
  %v1583 = vld [vmem:[%s3 + $0x30] sm:$0xff]
  %v1584 = vld [vmem:[%s3 + $0x38] sm:$0xff]
  %v1585 = vld [vmem:[%s3 + $0x40] sm:$0xff]
  %v1586 = vld [vmem:[%s3 + $0x48] sm:$0xff]
  %v1587 = vld [vmem:[%s3 + $0x50] sm:$0xff]
  %v1588 = vld [vmem:[%s3 + $0x58] sm:$0xff]
  %v1589 = vld [vmem:[%s3 + $0x60] sm:$0xff]
  %v1590 = vld [vmem:[%s3 + $0x68] sm:$0xff]
  %v1591 = vld [vmem:[%s3 + $0x70] sm:$0xff]
  %v1592 = vld [vmem:[%s3 + $0x78] sm:$0xff]
  %v1593 = vld [vmem:[%s3 + $0x80] sm:$0xff]
  %v1594 = vld [vmem:[%s3 + $0x88] sm:$0xff]
  %v1595 = vld [vmem:[%s3 + $0x90] sm:$0xff]
  %v1596 = vld [vmem:[%s3 + $0x98] sm:$0xff]
  %v1597 = vld [vmem:[%s3 + $0xa0] sm:$0xff]
  %v1598 = vld [vmem:[%s3 + $0xa8] sm:$0xff]
  %v1599 = vld [vmem:[%s3 + $0xb0] sm:$0xff]
  %v1600 = vld [vmem:[%s3 + $0xb8] sm:$0xff]
  %1602 = vset.pattern.permute.xlu0 0
  %1603 = vperm.xlu0 %1602, %v1577
  %v1604 = vpop.permute.xlu0 %1603
  %1607 = vset.pattern.permute.xlu0 0
  %1608 = vperm.xlu0 %1607, %v1578
  %v1609 = vpop.permute.xlu0 %1608
  %1612 = vset.pattern.permute.xlu0 0
  %1613 = vperm.xlu0 %1612, %v1579
  %v1614 = vpop.permute.xlu0 %1613
  %1617 = vset.pattern.permute.xlu0 0
  %1618 = vperm.xlu0 %1617, %v1580
  %v1619 = vpop.permute.xlu0 %1618
  %1622 = vset.pattern.permute.xlu0 0
  %1623 = vperm.xlu0 %1622, %v1581
  %v1624 = vpop.permute.xlu0 %1623
  %1627 = vset.pattern.permute.xlu0 0
  %1628 = vperm.xlu0 %1627, %v1582
  %v1629 = vpop.permute.xlu0 %1628
  %1632 = vset.pattern.permute.xlu0 0
  %1633 = vperm.xlu0 %1632, %v1583
  %v1634 = vpop.permute.xlu0 %1633
  %1637 = vset.pattern.permute.xlu0 0
  %1638 = vperm.xlu0 %1637, %v1584
  %v1639 = vpop.permute.xlu0 %1638
  %1642 = vset.pattern.permute.xlu0 0
  %1643 = vperm.xlu0 %1642, %v1585
  %v1644 = vpop.permute.xlu0 %1643
  %1647 = vset.pattern.permute.xlu0 0
  %1648 = vperm.xlu0 %1647, %v1586
  %v1649 = vpop.permute.xlu0 %1648
  %1652 = vset.pattern.permute.xlu0 0
  %1653 = vperm.xlu0 %1652, %v1587
  %v1654 = vpop.permute.xlu0 %1653
  %1657 = vset.pattern.permute.xlu0 0
  %1658 = vperm.xlu0 %1657, %v1588
  %v1659 = vpop.permute.xlu0 %1658
  %1662 = vset.pattern.permute.xlu0 0
  %1663 = vperm.xlu0 %1662, %v1589
  %v1664 = vpop.permute.xlu0 %1663
  %1667 = vset.pattern.permute.xlu0 0
  %1668 = vperm.xlu0 %1667, %v1590
  %v1669 = vpop.permute.xlu0 %1668
  %1672 = vset.pattern.permute.xlu0 0
  %1673 = vperm.xlu0 %1672, %v1591
  %v1674 = vpop.permute.xlu0 %1673
  %1677 = vset.pattern.permute.xlu0 0
  %1678 = vperm.xlu0 %1677, %v1592
  %v1679 = vpop.permute.xlu0 %1678
  %1682 = vset.pattern.permute.xlu0 0
  %1683 = vperm.xlu0 %1682, %v1593
  %v1684 = vpop.permute.xlu0 %1683
  %1687 = vset.pattern.permute.xlu0 0
  %1688 = vperm.xlu0 %1687, %v1594
  %v1689 = vpop.permute.xlu0 %1688
  %1692 = vset.pattern.permute.xlu0 0
  %1693 = vperm.xlu0 %1692, %v1595
  %v1694 = vpop.permute.xlu0 %1693
  %1697 = vset.pattern.permute.xlu0 0
  %1698 = vperm.xlu0 %1697, %v1596
  %v1699 = vpop.permute.xlu0 %1698
  %1702 = vset.pattern.permute.xlu0 0
  %1703 = vperm.xlu0 %1702, %v1597
  %v1704 = vpop.permute.xlu0 %1703
  %1707 = vset.pattern.permute.xlu0 0
  %1708 = vperm.xlu0 %1707, %v1598
  %v1709 = vpop.permute.xlu0 %1708
  %1712 = vset.pattern.permute.xlu0 0
  %1713 = vperm.xlu0 %1712, %v1599
  %v1714 = vpop.permute.xlu0 %1713
  %1717 = vset.pattern.permute.xlu0 0
  %1718 = vperm.xlu0 %1717, %v1600
  %v1719 = vpop.permute.xlu0 %1718
  %vm1721 = vcmask 785408
  %v1723 = vsel %vm1721, %v1415, 0
  %v1726 = vsel %vm1721, %v1422, 0
  %v1729 = vsel %vm1721, %v1429, 0
  %v1732 = vsel %vm1721, %v1436, 0
  %v1735 = vsel %vm1721, %v1443, 0
  %v1738 = vsel %vm1721, %v1450, 0
  %v1741 = vsel %vm1721, %v1457, 0
  %v1744 = vsel %vm1721, %v1464, 0
  %v1747 = vsel %vm1721, %v1471, 0
  %v1750 = vsel %vm1721, %v1478, 0
  %v1753 = vsel %vm1721, %v1485, 0
  %v1756 = vsel %vm1721, %v1492, 0
  %v1759 = vsel %vm1721, %v1499, 0
  %v1762 = vsel %vm1721, %v1506, 0
  %v1765 = vsel %vm1721, %v1513, 0
  %v1768 = vsel %vm1721, %v1520, 0
  %v1771 = vsel %vm1721, %v1527, 0
  %v1774 = vsel %vm1721, %v1534, 0
  %v1777 = vsel %vm1721, %v1541, 0
  %v1780 = vsel %vm1721, %v1548, 0
  %v1783 = vsel %vm1721, %v1555, 0
  %v1786 = vsel %vm1721, %v1562, 0
  %v1789 = vsel %vm1721, %v1569, 0
  %v1792 = vsel %vm1721, %v1576, 0
  %1794 = vmatprep.subr.mxu0 %v1098
  %1795 = vmatpush1.msra.mxu0 %v1097
  %1796 = vmatprep.subr.mxu0 %v1100
  %1797 = vmatpush1.msra.mxu0 %v1099
  %1798 = vmatprep.subr.mxu0 %v1102
  %1799 = vmatpush1.msra.mxu0 %v1101
  %1800 = vmatprep.subr.mxu0 %v1104
  %1801 = vmatpush1.msra.mxu0 %v1103
  %1802 = vmatprep.subr.mxu0 %v1106
  %1803 = vmatpush1.msra.mxu0 %v1105
  %1804 = vmatprep.subr.mxu0 %v1108
  %1805 = vmatpush1.msra.mxu0 %v1107
  %1806 = vmatprep.subr.mxu0 %v1110
  %1807 = vmatpush1.msra.mxu0 %v1109
  %1808 = vmatprep.subr.mxu0 %v1112
  %1809 = vmatpush1.msra.mxu0 %v1111
  %1810 = vmatprep.subr.mxu0 %v1114
  %1811 = vmatpush1.msra.mxu0 %v1113
  %1812 = vmatprep.subr.mxu0 %v1116
  %1813 = vmatpush1.msra.mxu0 %v1115
  %1814 = vmatprep.subr.mxu0 %v1118
  %1815 = vmatpush1.msra.mxu0 %v1117
  %1816 = vmatprep.subr.mxu0 %v1120
  %1817 = vmatpush1.msra.mxu0 %v1119
  %1818 = vmatprep.subr.mxu0 %v1122
  %1819 = vmatpush1.msra.mxu0 %v1121
  %1820 = vmatprep.subr.mxu0 %v1124
  %1821 = vmatpush1.msra.mxu0 %v1123
  %1822 = vmatprep.subr.mxu0 %v1126
  %1823 = vmatpush1.msra.mxu0 %v1125
  %1824 = vmatprep.subr.mxu0 %v1128
  %1825 = vmatpush1.msra.mxu0 %v1127
  %1826 = vmatprep.subr.mxu0 %v1130
  %1827 = vmatpush1.msra.mxu0 %v1129
  %1828 = vmatprep.subr.mxu0 %v1132
  %1829 = vmatpush1.msra.mxu0 %v1131
  %1830 = vmatprep.subr.mxu0 %v1134
  %1831 = vmatpush1.msra.mxu0 %v1133
  %1832 = vmatprep.subr.mxu0 %v1136
  %1833 = vmatpush1.msra.mxu0 %v1135
  %1834 = vmatprep.subr.mxu0 %v1138
  %1835 = vmatpush1.msra.mxu0 %v1137
  %1836 = vmatprep.subr.mxu0 %v1140
  %1837 = vmatpush1.msra.mxu0 %v1139
  %1838 = vmatprep.subr.mxu0 %v1142
  %1839 = vmatpush1.msra.mxu0 %v1141
  %1840 = vmatprep.subr.mxu0 %v1144
  %1841 = vmatpush1.msra.mxu0 %v1143
  %1842 = vmatprep.subr.mxu0 %v1146
  %1843 = vmatpush1.msra.mxu0 %v1145
  %1844 = vmatprep.subr.mxu0 %v1148
  %1845 = vmatpush1.msra.mxu0 %v1147
  %1846 = vmatprep.subr.mxu0 %v1150
  %1847 = vmatpush1.msra.mxu0 %v1149
  %1848 = vmatprep.subr.mxu0 %v1152
  %1849 = vmatpush1.msra.mxu0 %v1151
  %1850 = vmatprep.subr.mxu0 %v1154
  %1851 = vmatpush1.msra.mxu0 %v1153
  %1852 = vmatprep.subr.mxu0 %v1156
  %1853 = vmatpush1.msra.mxu0 %v1155
  %1854 = vmatprep.subr.mxu0 %v1158
  %1855 = vmatpush1.msra.mxu0 %v1157
  %1856 = vmatprep.subr.mxu0 %v1160
  %1857 = vmatpush1.msra.mxu0 %v1159
  %1858 = vmatprep.mubr.f32.mxu0 %v1410
  %1859 = vmatmul.mubr.f32.gmra.mrb[0].mxu0 %v1409
  %v1860 = vpop.f32.mrb[0].mxu0
  %v1861 = vadd.f32 %v1604, %v1860
  %v1862 = vpop.f32.mrb[0].mxu0
  %v1863 = vadd.f32 %v1604, %v1862
  %1864 = vmatprep.mubr.f32.mxu0 %v1417
  %1865 = vmatmul.mubr.f32.gmra.mrb[0].mxu0 %v1416
  %v1866 = vpop.f32.mrb[0].mxu0
  %v1867 = vadd.f32 %v1609, %v1866
  %v1868 = vpop.f32.mrb[0].mxu0
  %v1869 = vadd.f32 %v1609, %v1868
  %1870 = vmatprep.mubr.f32.mxu0 %v1424
  %1871 = vmatmul.mubr.f32.gmra.mrb[0].mxu0 %v1423
  %v1872 = vpop.f32.mrb[0].mxu0
  %v1873 = vadd.f32 %v1614, %v1872
  %v1874 = vpop.f32.mrb[0].mxu0
  %v1875 = vadd.f32 %v1614, %v1874
  %1876 = vmatprep.mubr.f32.mxu0 %v1431
  %1877 = vmatmul.mubr.f32.gmra.mrb[0].mxu0 %v1430
  %v1878 = vpop.f32.mrb[0].mxu0
  %v1879 = vadd.f32 %v1619, %v1878
  %v1880 = vpop.f32.mrb[0].mxu0
  %v1881 = vadd.f32 %v1619, %v1880
  %1882 = vmatprep.mubr.f32.mxu0 %v1438
  %1883 = vmatmul.mubr.f32.gmra.mrb[0].mxu0 %v1437
  %v1884 = vpop.f32.mrb[0].mxu0
  %v1885 = vadd.f32 %v1624, %v1884
  %v1886 = vpop.f32.mrb[0].mxu0
  %v1887 = vadd.f32 %v1624, %v1886
  %1888 = vmatprep.mubr.f32.mxu0 %v1445
  %1889 = vmatmul.mubr.f32.gmra.mrb[0].mxu0 %v1444
  %v1890 = vpop.f32.mrb[0].mxu0
  %v1891 = vadd.f32 %v1629, %v1890
  %v1892 = vpop.f32.mrb[0].mxu0
  %v1893 = vadd.f32 %v1629, %v1892
  %1894 = vmatprep.mubr.f32.mxu0 %v1452
  %1895 = vmatmul.mubr.f32.gmra.mrb[0].mxu0 %v1451
  %v1896 = vpop.f32.mrb[0].mxu0
  %v1897 = vadd.f32 %v1634, %v1896
  %v1898 = vpop.f32.mrb[0].mxu0
  %v1899 = vadd.f32 %v1634, %v1898
  %1900 = vmatprep.mubr.f32.mxu0 %v1459
  %1901 = vmatmul.mubr.f32.gmra.mrb[0].mxu0 %v1458
  %v1902 = vpop.f32.mrb[0].mxu0
  %v1903 = vadd.f32 %v1639, %v1902
  %v1904 = vpop.f32.mrb[0].mxu0
  %v1905 = vadd.f32 %v1639, %v1904
  %1906 = vmatprep.mubr.f32.mxu0 %v1466
  %1907 = vmatmul.mubr.f32.gmra.mrb[0].mxu0 %v1465
  %v1908 = vpop.f32.mrb[0].mxu0
  %v1909 = vadd.f32 %v1644, %v1908
  %v1910 = vpop.f32.mrb[0].mxu0
  %v1911 = vadd.f32 %v1644, %v1910
  %1912 = vmatprep.mubr.f32.mxu0 %v1473
  %1913 = vmatmul.mubr.f32.gmra.mrb[0].mxu0 %v1472
  %v1914 = vpop.f32.mrb[0].mxu0
  %v1915 = vadd.f32 %v1649, %v1914
  %v1916 = vpop.f32.mrb[0].mxu0
  %v1917 = vadd.f32 %v1649, %v1916
  %1918 = vmatprep.mubr.f32.mxu0 %v1480
  %1919 = vmatmul.mubr.f32.gmra.mrb[0].mxu0 %v1479
  %v1920 = vpop.f32.mrb[0].mxu0
  %v1921 = vadd.f32 %v1654, %v1920
  %v1922 = vpop.f32.mrb[0].mxu0
  %v1923 = vadd.f32 %v1654, %v1922
  %1924 = vmatprep.mubr.f32.mxu0 %v1487
  %1925 = vmatmul.mubr.f32.gmra.mrb[0].mxu0 %v1486
  %v1926 = vpop.f32.mrb[0].mxu0
  %v1927 = vadd.f32 %v1659, %v1926
  %v1928 = vpop.f32.mrb[0].mxu0
  %v1929 = vadd.f32 %v1659, %v1928
  %1930 = vmatprep.mubr.f32.mxu0 %v1494
  %1931 = vmatmul.mubr.f32.gmra.mrb[0].mxu0 %v1493
  %v1932 = vpop.f32.mrb[0].mxu0
  %v1933 = vadd.f32 %v1664, %v1932
  %v1934 = vpop.f32.mrb[0].mxu0
  %v1935 = vadd.f32 %v1664, %v1934
  %1936 = vmatprep.mubr.f32.mxu0 %v1501
  %1937 = vmatmul.mubr.f32.gmra.mrb[0].mxu0 %v1500
  %v1938 = vpop.f32.mrb[0].mxu0
  %v1939 = vadd.f32 %v1669, %v1938
  %v1940 = vpop.f32.mrb[0].mxu0
  %v1941 = vadd.f32 %v1669, %v1940
  %1942 = vmatprep.mubr.f32.mxu0 %v1508
  %1943 = vmatmul.mubr.f32.gmra.mrb[0].mxu0 %v1507
  %v1944 = vpop.f32.mrb[0].mxu0
  %v1945 = vadd.f32 %v1674, %v1944
  %v1946 = vpop.f32.mrb[0].mxu0
  %v1947 = vadd.f32 %v1674, %v1946
  %1948 = vmatprep.mubr.f32.mxu0 %v1515
  %1949 = vmatmul.mubr.f32.gmra.mrb[0].mxu0 %v1514
  %v1950 = vpop.f32.mrb[0].mxu0
  %v1951 = vadd.f32 %v1679, %v1950
  %v1952 = vpop.f32.mrb[0].mxu0
  %v1953 = vadd.f32 %v1679, %v1952
  %1954 = vmatprep.mubr.f32.mxu0 %v1522
  %1955 = vmatmul.mubr.f32.gmra.mrb[0].mxu0 %v1521
  %v1956 = vpop.f32.mrb[0].mxu0
  %v1957 = vadd.f32 %v1684, %v1956
  %v1958 = vpop.f32.mrb[0].mxu0
  %v1959 = vadd.f32 %v1684, %v1958
  %1960 = vmatprep.mubr.f32.mxu0 %v1529
  %1961 = vmatmul.mubr.f32.gmra.mrb[0].mxu0 %v1528
  %v1962 = vpop.f32.mrb[0].mxu0
  %v1963 = vadd.f32 %v1689, %v1962
  %v1964 = vpop.f32.mrb[0].mxu0
  %v1965 = vadd.f32 %v1689, %v1964
  %1966 = vmatprep.mubr.f32.mxu0 %v1536
  %1967 = vmatmul.mubr.f32.gmra.mrb[0].mxu0 %v1535
  %v1968 = vpop.f32.mrb[0].mxu0
  %v1969 = vadd.f32 %v1694, %v1968
  %v1970 = vpop.f32.mrb[0].mxu0
  %v1971 = vadd.f32 %v1694, %v1970
  %1972 = vmatprep.mubr.f32.mxu0 %v1543
  %1973 = vmatmul.mubr.f32.gmra.mrb[0].mxu0 %v1542
  %v1974 = vpop.f32.mrb[0].mxu0
  %v1975 = vadd.f32 %v1699, %v1974
  %v1976 = vpop.f32.mrb[0].mxu0
  %v1977 = vadd.f32 %v1699, %v1976
  %1978 = vmatprep.mubr.f32.mxu0 %v1550
  %1979 = vmatmul.mubr.f32.gmra.mrb[0].mxu0 %v1549
  %v1980 = vpop.f32.mrb[0].mxu0
  %v1981 = vadd.f32 %v1704, %v1980
  %v1982 = vpop.f32.mrb[0].mxu0
  %v1983 = vadd.f32 %v1704, %v1982
  %1984 = vmatprep.mubr.f32.mxu0 %v1557
  %1985 = vmatmul.mubr.f32.gmra.mrb[0].mxu0 %v1556
  %v1986 = vpop.f32.mrb[0].mxu0
  %v1987 = vadd.f32 %v1709, %v1986
  %v1988 = vpop.f32.mrb[0].mxu0
  %v1989 = vadd.f32 %v1709, %v1988
  %1990 = vmatprep.mubr.f32.mxu0 %v1564
  %1991 = vmatmul.mubr.f32.gmra.mrb[0].mxu0 %v1563
  %v1992 = vpop.f32.mrb[0].mxu0
  %v1993 = vadd.f32 %v1714, %v1992
  %v1994 = vpop.f32.mrb[0].mxu0
  %v1995 = vadd.f32 %v1714, %v1994
  %1996 = vmatprep.mubr.f32.mxu0 %v1571
  %1997 = vmatmul.mubr.f32.gmra.mrb[0].mxu0 %v1570
  %v1998 = vpop.f32.mrb[0].mxu0
  %v1999 = vadd.f32 %v1719, %v1998
  %v2000 = vpop.f32.mrb[0].mxu0
  %v2001 = vadd.f32 %v1719, %v2000
  %2002 = vdwg.mxu0
  %2003 = vmatprep.subr.mxu0 %v1162
  %2004 = vmatpush1.msra.mxu0 %v1161
  %2005 = vmatprep.subr.mxu0 %v1164
  %2006 = vmatpush1.msra.mxu0 %v1163
  %2007 = vmatprep.subr.mxu0 %v1166
  %2008 = vmatpush1.msra.mxu0 %v1165
  %2009 = vmatprep.subr.mxu0 %v1168
  %2010 = vmatpush1.msra.mxu0 %v1167
  %2011 = vmatprep.subr.mxu0 %v1170
  %2012 = vmatpush1.msra.mxu0 %v1169
  %2013 = vmatprep.subr.mxu0 %v1172
  %2014 = vmatpush1.msra.mxu0 %v1171
  %2015 = vmatprep.subr.mxu0 %v1174
  %2016 = vmatpush1.msra.mxu0 %v1173
  %2017 = vmatprep.subr.mxu0 %v1176
  %2018 = vmatpush1.msra.mxu0 %v1175
  %2019 = vmatprep.subr.mxu0 %v1178
  %2020 = vmatpush1.msra.mxu0 %v1177
  %2021 = vmatprep.subr.mxu0 %v1180
  %2022 = vmatpush1.msra.mxu0 %v1179
  %2023 = vmatprep.subr.mxu0 %v1182
  %2024 = vmatpush1.msra.mxu0 %v1181
  %2025 = vmatprep.subr.mxu0 %v1184
  %2026 = vmatpush1.msra.mxu0 %v1183
  %2027 = vmatprep.subr.mxu0 %v1186
  %2028 = vmatpush1.msra.mxu0 %v1185
  %2029 = vmatprep.subr.mxu0 %v1188
  %2030 = vmatpush1.msra.mxu0 %v1187
  %2031 = vmatprep.subr.mxu0 %v1190
  %2032 = vmatpush1.msra.mxu0 %v1189
  %2033 = vmatprep.subr.mxu0 %v1192
  %2034 = vmatpush1.msra.mxu0 %v1191
  %2035 = vmatprep.subr.mxu0 %v1194
  %2036 = vmatpush1.msra.mxu0 %v1193
  %2037 = vmatprep.subr.mxu0 %v1196
  %2038 = vmatpush1.msra.mxu0 %v1195
  %2039 = vmatprep.subr.mxu0 %v1198
  %2040 = vmatpush1.msra.mxu0 %v1197
  %2041 = vmatprep.subr.mxu0 %v1200
  %2042 = vmatpush1.msra.mxu0 %v1199
  %2043 = vmatprep.subr.mxu0 %v1202
  %2044 = vmatpush1.msra.mxu0 %v1201
  %2045 = vmatprep.subr.mxu0 %v1204
  %2046 = vmatpush1.msra.mxu0 %v1203
  %2047 = vmatprep.subr.mxu0 %v1206
  %2048 = vmatpush1.msra.mxu0 %v1205
  %2049 = vmatprep.subr.mxu0 %v1208
  %2050 = vmatpush1.msra.mxu0 %v1207
  %2051 = vmatprep.subr.mxu0 %v1210
  %2052 = vmatpush1.msra.mxu0 %v1209
  %2053 = vmatprep.subr.mxu0 %v1212
  %2054 = vmatpush1.msra.mxu0 %v1211
  %2055 = vmatprep.subr.mxu0 %v1214
  %2056 = vmatpush1.msra.mxu0 %v1213
  %2057 = vmatprep.subr.mxu0 %v1216
  %2058 = vmatpush1.msra.mxu0 %v1215
  %2059 = vmatprep.subr.mxu0 %v1218
  %2060 = vmatpush1.msra.mxu0 %v1217
  %2061 = vmatprep.subr.mxu0 %v1220
  %2062 = vmatpush1.msra.mxu0 %v1219
  %2063 = vmatprep.subr.mxu0 %v1222
  %2064 = vmatpush1.msra.mxu0 %v1221
  %2065 = vmatprep.subr.mxu0 %v1224
  %2066 = vmatpush1.msra.mxu0 %v1223
  %2067 = vmatprep.mubr.f32.mxu0 %v1412
  %2068 = vmatmul.mubr.f32.gmra.mrb[0].mxu0 %v1411
  %v2069 = vpop.f32.mrb[0].mxu0
  %v2070 = vadd.f32 %v1861, %v2069
  %v2071 = vpop.f32.mrb[0].mxu0
  %v2072 = vadd.f32 %v1863, %v2071
  %2073 = vmatprep.mubr.f32.mxu0 %v1419
  %2074 = vmatmul.mubr.f32.gmra.mrb[0].mxu0 %v1418
  %v2075 = vpop.f32.mrb[0].mxu0
  %v2076 = vadd.f32 %v1867, %v2075
  %v2077 = vpop.f32.mrb[0].mxu0
  %v2078 = vadd.f32 %v1869, %v2077
  %2079 = vmatprep.mubr.f32.mxu0 %v1426
  %2080 = vmatmul.mubr.f32.gmra.mrb[0].mxu0 %v1425
  %v2081 = vpop.f32.mrb[0].mxu0
  %v2082 = vadd.f32 %v1873, %v2081
  %v2083 = vpop.f32.mrb[0].mxu0
  %v2084 = vadd.f32 %v1875, %v2083
  %2085 = vmatprep.mubr.f32.mxu0 %v1433
  %2086 = vmatmul.mubr.f32.gmra.mrb[0].mxu0 %v1432
  %v2087 = vpop.f32.mrb[0].mxu0
  %v2088 = vadd.f32 %v1879, %v2087
  %v2089 = vpop.f32.mrb[0].mxu0
  %v2090 = vadd.f32 %v1881, %v2089
  %2091 = vmatprep.mubr.f32.mxu0 %v1440
  %2092 = vmatmul.mubr.f32.gmra.mrb[0].mxu0 %v1439
  %v2093 = vpop.f32.mrb[0].mxu0
  %v2094 = vadd.f32 %v1885, %v2093
  %v2095 = vpop.f32.mrb[0].mxu0
  %v2096 = vadd.f32 %v1887, %v2095
  %2097 = vmatprep.mubr.f32.mxu0 %v1447
  %2098 = vmatmul.mubr.f32.gmra.mrb[0].mxu0 %v1446
  %v2099 = vpop.f32.mrb[0].mxu0
  %v2100 = vadd.f32 %v1891, %v2099
  %v2101 = vpop.f32.mrb[0].mxu0
  %v2102 = vadd.f32 %v1893, %v2101
  %2103 = vmatprep.mubr.f32.mxu0 %v1454
  %2104 = vmatmul.mubr.f32.gmra.mrb[0].mxu0 %v1453
  %v2105 = vpop.f32.mrb[0].mxu0
  %v2106 = vadd.f32 %v1897, %v2105
  %v2107 = vpop.f32.mrb[0].mxu0
  %v2108 = vadd.f32 %v1899, %v2107
  %2109 = vmatprep.mubr.f32.mxu0 %v1461
  %2110 = vmatmul.mubr.f32.gmra.mrb[0].mxu0 %v1460
  %v2111 = vpop.f32.mrb[0].mxu0
  %v2112 = vadd.f32 %v1903, %v2111
  %v2113 = vpop.f32.mrb[0].mxu0
  %v2114 = vadd.f32 %v1905, %v2113
  %2115 = vmatprep.mubr.f32.mxu0 %v1468
  %2116 = vmatmul.mubr.f32.gmra.mrb[0].mxu0 %v1467
  %v2117 = vpop.f32.mrb[0].mxu0
  %v2118 = vadd.f32 %v1909, %v2117
  %v2119 = vpop.f32.mrb[0].mxu0
  %v2120 = vadd.f32 %v1911, %v2119
  %2121 = vmatprep.mubr.f32.mxu0 %v1475
  %2122 = vmatmul.mubr.f32.gmra.mrb[0].mxu0 %v1474
  %v2123 = vpop.f32.mrb[0].mxu0
  %v2124 = vadd.f32 %v1915, %v2123
  %v2125 = vpop.f32.mrb[0].mxu0
  %v2126 = vadd.f32 %v1917, %v2125
  %2127 = vmatprep.mubr.f32.mxu0 %v1482
  %2128 = vmatmul.mubr.f32.gmra.mrb[0].mxu0 %v1481
  %v2129 = vpop.f32.mrb[0].mxu0
  %v2130 = vadd.f32 %v1921, %v2129
  %v2131 = vpop.f32.mrb[0].mxu0
  %v2132 = vadd.f32 %v1923, %v2131
  %2133 = vmatprep.mubr.f32.mxu0 %v1489
  %2134 = vmatmul.mubr.f32.gmra.mrb[0].mxu0 %v1488
  %v2135 = vpop.f32.mrb[0].mxu0
  %v2136 = vadd.f32 %v1927, %v2135
  %v2137 = vpop.f32.mrb[0].mxu0
  %v2138 = vadd.f32 %v1929, %v2137
  %2139 = vmatprep.mubr.f32.mxu0 %v1496
  %2140 = vmatmul.mubr.f32.gmra.mrb[0].mxu0 %v1495
  %v2141 = vpop.f32.mrb[0].mxu0
  %v2142 = vadd.f32 %v1933, %v2141
  %v2143 = vpop.f32.mrb[0].mxu0
  %v2144 = vadd.f32 %v1935, %v2143
  %2145 = vmatprep.mubr.f32.mxu0 %v1503
  %2146 = vmatmul.mubr.f32.gmra.mrb[0].mxu0 %v1502
  %v2147 = vpop.f32.mrb[0].mxu0
  %v2148 = vadd.f32 %v1939, %v2147
  %v2149 = vpop.f32.mrb[0].mxu0
  %v2150 = vadd.f32 %v1941, %v2149
  %2151 = vmatprep.mubr.f32.mxu0 %v1510
  %2152 = vmatmul.mubr.f32.gmra.mrb[0].mxu0 %v1509
  %v2153 = vpop.f32.mrb[0].mxu0
  %v2154 = vadd.f32 %v1945, %v2153
  %v2155 = vpop.f32.mrb[0].mxu0
  %v2156 = vadd.f32 %v1947, %v2155
  %2157 = vmatprep.mubr.f32.mxu0 %v1517
  %2158 = vmatmul.mubr.f32.gmra.mrb[0].mxu0 %v1516
  %v2159 = vpop.f32.mrb[0].mxu0
  %v2160 = vadd.f32 %v1951, %v2159
  %v2161 = vpop.f32.mrb[0].mxu0
  %v2162 = vadd.f32 %v1953, %v2161
  %2163 = vmatprep.mubr.f32.mxu0 %v1524
  %2164 = vmatmul.mubr.f32.gmra.mrb[0].mxu0 %v1523
  %v2165 = vpop.f32.mrb[0].mxu0
  %v2166 = vadd.f32 %v1957, %v2165
  %v2167 = vpop.f32.mrb[0].mxu0
  %v2168 = vadd.f32 %v1959, %v2167
  %2169 = vmatprep.mubr.f32.mxu0 %v1531
  %2170 = vmatmul.mubr.f32.gmra.mrb[0].mxu0 %v1530
  %v2171 = vpop.f32.mrb[0].mxu0
  %v2172 = vadd.f32 %v1963, %v2171
  %v2173 = vpop.f32.mrb[0].mxu0
  %v2174 = vadd.f32 %v1965, %v2173
  %2175 = vmatprep.mubr.f32.mxu0 %v1538
  %2176 = vmatmul.mubr.f32.gmra.mrb[0].mxu0 %v1537
  %v2177 = vpop.f32.mrb[0].mxu0
  %v2178 = vadd.f32 %v1969, %v2177
  %v2179 = vpop.f32.mrb[0].mxu0
  %v2180 = vadd.f32 %v1971, %v2179
  %2181 = vmatprep.mubr.f32.mxu0 %v1545
  %2182 = vmatmul.mubr.f32.gmra.mrb[0].mxu0 %v1544
  %v2183 = vpop.f32.mrb[0].mxu0
  %v2184 = vadd.f32 %v1975, %v2183
  %v2185 = vpop.f32.mrb[0].mxu0
  %v2186 = vadd.f32 %v1977, %v2185
  %2187 = vmatprep.mubr.f32.mxu0 %v1552
  %2188 = vmatmul.mubr.f32.gmra.mrb[0].mxu0 %v1551
  %v2189 = vpop.f32.mrb[0].mxu0
  %v2190 = vadd.f32 %v1981, %v2189
  %v2191 = vpop.f32.mrb[0].mxu0
  %v2192 = vadd.f32 %v1983, %v2191
  %2193 = vmatprep.mubr.f32.mxu0 %v1559
  %2194 = vmatmul.mubr.f32.gmra.mrb[0].mxu0 %v1558
  %v2195 = vpop.f32.mrb[0].mxu0
  %v2196 = vadd.f32 %v1987, %v2195
  %v2197 = vpop.f32.mrb[0].mxu0
  %v2198 = vadd.f32 %v1989, %v2197
  %2199 = vmatprep.mubr.f32.mxu0 %v1566
  %2200 = vmatmul.mubr.f32.gmra.mrb[0].mxu0 %v1565
  %v2201 = vpop.f32.mrb[0].mxu0
  %v2202 = vadd.f32 %v1993, %v2201
  %v2203 = vpop.f32.mrb[0].mxu0
  %v2204 = vadd.f32 %v1995, %v2203
  %2205 = vmatprep.mubr.f32.mxu0 %v1573
  %2206 = vmatmul.mubr.f32.gmra.mrb[0].mxu0 %v1572
  %v2207 = vpop.f32.mrb[0].mxu0
  %v2208 = vadd.f32 %v1999, %v2207
  %v2209 = vpop.f32.mrb[0].mxu0
  %v2210 = vadd.f32 %v2001, %v2209
  %2211 = vdwg.mxu0
  %2212 = vmatprep.subr.mxu0 %v1226
  %2213 = vmatpush1.msra.mxu0 %v1225
  %2214 = vmatprep.subr.mxu0 %v1228
  %2215 = vmatpush1.msra.mxu0 %v1227
  %2216 = vmatprep.subr.mxu0 %v1230
  %2217 = vmatpush1.msra.mxu0 %v1229
  %2218 = vmatprep.subr.mxu0 %v1232
  %2219 = vmatpush1.msra.mxu0 %v1231
  %2220 = vmatprep.subr.mxu0 %v1234
  %2221 = vmatpush1.msra.mxu0 %v1233
  %2222 = vmatprep.subr.mxu0 %v1236
  %2223 = vmatpush1.msra.mxu0 %v1235
  %2224 = vmatprep.subr.mxu0 %v1238
  %2225 = vmatpush1.msra.mxu0 %v1237
  %2226 = vmatprep.subr.mxu0 %v1240
  %2227 = vmatpush1.msra.mxu0 %v1239
  %2228 = vmatprep.subr.mxu0 %v1242
  %2229 = vmatpush1.msra.mxu0 %v1241
  %2230 = vmatprep.subr.mxu0 %v1244
  %2231 = vmatpush1.msra.mxu0 %v1243
  %2232 = vmatprep.subr.mxu0 %v1246
  %2233 = vmatpush1.msra.mxu0 %v1245
  %2234 = vmatprep.subr.mxu0 %v1248
  %2235 = vmatpush1.msra.mxu0 %v1247
  %2236 = vmatprep.subr.mxu0 %v1250
  %2237 = vmatpush1.msra.mxu0 %v1249
  %2238 = vmatprep.subr.mxu0 %v1252
  %2239 = vmatpush1.msra.mxu0 %v1251
  %2240 = vmatprep.subr.mxu0 %v1254
  %2241 = vmatpush1.msra.mxu0 %v1253
  %2242 = vmatprep.subr.mxu0 %v1256
  %2243 = vmatpush1.msra.mxu0 %v1255
  %2244 = vmatprep.subr.mxu0 %v1258
  %2245 = vmatpush1.msra.mxu0 %v1257
  %2246 = vmatprep.subr.mxu0 %v1260
  %2247 = vmatpush1.msra.mxu0 %v1259
  %2248 = vmatprep.subr.mxu0 %v1262
  %2249 = vmatpush1.msra.mxu0 %v1261
  %2250 = vmatprep.subr.mxu0 %v1264
  %2251 = vmatpush1.msra.mxu0 %v1263
  %2252 = vmatprep.subr.mxu0 %v1266
  %2253 = vmatpush1.msra.mxu0 %v1265
  %2254 = vmatprep.subr.mxu0 %v1268
  %2255 = vmatpush1.msra.mxu0 %v1267
  %2256 = vmatprep.subr.mxu0 %v1270
  %2257 = vmatpush1.msra.mxu0 %v1269
  %2258 = vmatprep.subr.mxu0 %v1272
  %2259 = vmatpush1.msra.mxu0 %v1271
  %2260 = vmatprep.subr.mxu0 %v1274
  %2261 = vmatpush1.msra.mxu0 %v1273
  %2262 = vmatprep.subr.mxu0 %v1276
  %2263 = vmatpush1.msra.mxu0 %v1275
  %2264 = vmatprep.subr.mxu0 %v1278
  %2265 = vmatpush1.msra.mxu0 %v1277
  %2266 = vmatprep.subr.mxu0 %v1280
  %2267 = vmatpush1.msra.mxu0 %v1279
  %2268 = vmatprep.subr.mxu0 %v1282
  %2269 = vmatpush1.msra.mxu0 %v1281
  %2270 = vmatprep.subr.mxu0 %v1284
  %2271 = vmatpush1.msra.mxu0 %v1283
  %2272 = vmatprep.subr.mxu0 %v1286
  %2273 = vmatpush1.msra.mxu0 %v1285
  %2274 = vmatprep.subr.mxu0 %v1288
  %2275 = vmatpush1.msra.mxu0 %v1287
  %2276 = vmatprep.mubr.f32.mxu0 %v1414
  %2277 = vmatmul.mubr.f32.gmra.mrb[0].mxu0 %v1413
  %v2278 = vpop.f32.mrb[0].mxu0
  %v2279 = vadd.f32 %v2070, %v2278
  %v2280 = vpop.f32.mrb[0].mxu0
  %v2281 = vadd.f32 %v2072, %v2280
  %2282 = vmatprep.mubr.f32.mxu0 %v1421
  %2283 = vmatmul.mubr.f32.gmra.mrb[0].mxu0 %v1420
  %v2284 = vpop.f32.mrb[0].mxu0
  %v2285 = vadd.f32 %v2076, %v2284
  %v2286 = vpop.f32.mrb[0].mxu0
  %v2287 = vadd.f32 %v2078, %v2286
  %2288 = vmatprep.mubr.f32.mxu0 %v1428
  %2289 = vmatmul.mubr.f32.gmra.mrb[0].mxu0 %v1427
  %v2290 = vpop.f32.mrb[0].mxu0
  %v2291 = vadd.f32 %v2082, %v2290
  %v2292 = vpop.f32.mrb[0].mxu0
  %v2293 = vadd.f32 %v2084, %v2292
  %2294 = vmatprep.mubr.f32.mxu0 %v1435
  %2295 = vmatmul.mubr.f32.gmra.mrb[0].mxu0 %v1434
  %v2296 = vpop.f32.mrb[0].mxu0
  %v2297 = vadd.f32 %v2088, %v2296
  %v2298 = vpop.f32.mrb[0].mxu0
  %v2299 = vadd.f32 %v2090, %v2298
  %2300 = vmatprep.mubr.f32.mxu0 %v1442
  %2301 = vmatmul.mubr.f32.gmra.mrb[0].mxu0 %v1441
  %v2302 = vpop.f32.mrb[0].mxu0
  %v2303 = vadd.f32 %v2094, %v2302
  %v2304 = vpop.f32.mrb[0].mxu0
  %v2305 = vadd.f32 %v2096, %v2304
  %2306 = vmatprep.mubr.f32.mxu0 %v1449
  %2307 = vmatmul.mubr.f32.gmra.mrb[0].mxu0 %v1448
  %v2308 = vpop.f32.mrb[0].mxu0
  %v2309 = vadd.f32 %v2100, %v2308
  %v2310 = vpop.f32.mrb[0].mxu0
  %v2311 = vadd.f32 %v2102, %v2310
  %2312 = vmatprep.mubr.f32.mxu0 %v1456
  %2313 = vmatmul.mubr.f32.gmra.mrb[0].mxu0 %v1455
  %v2314 = vpop.f32.mrb[0].mxu0
  %v2315 = vadd.f32 %v2106, %v2314
  %v2316 = vpop.f32.mrb[0].mxu0
  %v2317 = vadd.f32 %v2108, %v2316
  %2318 = vmatprep.mubr.f32.mxu0 %v1463
  %2319 = vmatmul.mubr.f32.gmra.mrb[0].mxu0 %v1462
  %v2320 = vpop.f32.mrb[0].mxu0
  %v2321 = vadd.f32 %v2112, %v2320
  %v2322 = vpop.f32.mrb[0].mxu0
  %v2323 = vadd.f32 %v2114, %v2322
  %2324 = vmatprep.mubr.f32.mxu0 %v1470
  %2325 = vmatmul.mubr.f32.gmra.mrb[0].mxu0 %v1469
  %v2326 = vpop.f32.mrb[0].mxu0
  %v2327 = vadd.f32 %v2118, %v2326
  %v2328 = vpop.f32.mrb[0].mxu0
  %v2329 = vadd.f32 %v2120, %v2328
  %2330 = vmatprep.mubr.f32.mxu0 %v1477
  %2331 = vmatmul.mubr.f32.gmra.mrb[0].mxu0 %v1476
  %v2332 = vpop.f32.mrb[0].mxu0
  %v2333 = vadd.f32 %v2124, %v2332
  %v2334 = vpop.f32.mrb[0].mxu0
  %v2335 = vadd.f32 %v2126, %v2334
  %2336 = vmatprep.mubr.f32.mxu0 %v1484
  %2337 = vmatmul.mubr.f32.gmra.mrb[0].mxu0 %v1483
  %v2338 = vpop.f32.mrb[0].mxu0
  %v2339 = vadd.f32 %v2130, %v2338
  %v2340 = vpop.f32.mrb[0].mxu0
  %v2341 = vadd.f32 %v2132, %v2340
  %2342 = vmatprep.mubr.f32.mxu0 %v1491
  %2343 = vmatmul.mubr.f32.gmra.mrb[0].mxu0 %v1490
  %v2344 = vpop.f32.mrb[0].mxu0
  %v2345 = vadd.f32 %v2136, %v2344
  %v2346 = vpop.f32.mrb[0].mxu0
  %v2347 = vadd.f32 %v2138, %v2346
  %2348 = vmatprep.mubr.f32.mxu0 %v1498
  %2349 = vmatmul.mubr.f32.gmra.mrb[0].mxu0 %v1497
  %v2350 = vpop.f32.mrb[0].mxu0
  %v2351 = vadd.f32 %v2142, %v2350
  %v2352 = vpop.f32.mrb[0].mxu0
  %v2353 = vadd.f32 %v2144, %v2352
  %2354 = vmatprep.mubr.f32.mxu0 %v1505
  %2355 = vmatmul.mubr.f32.gmra.mrb[0].mxu0 %v1504
  %v2356 = vpop.f32.mrb[0].mxu0
  %v2357 = vadd.f32 %v2148, %v2356
  %v2358 = vpop.f32.mrb[0].mxu0
  %v2359 = vadd.f32 %v2150, %v2358
  %2360 = vmatprep.mubr.f32.mxu0 %v1512
  %2361 = vmatmul.mubr.f32.gmra.mrb[0].mxu0 %v1511
  %v2362 = vpop.f32.mrb[0].mxu0
  %v2363 = vadd.f32 %v2154, %v2362
  %v2364 = vpop.f32.mrb[0].mxu0
  %v2365 = vadd.f32 %v2156, %v2364
  %2366 = vmatprep.mubr.f32.mxu0 %v1519
  %2367 = vmatmul.mubr.f32.gmra.mrb[0].mxu0 %v1518
  %v2368 = vpop.f32.mrb[0].mxu0
  %v2369 = vadd.f32 %v2160, %v2368
  %v2370 = vpop.f32.mrb[0].mxu0
  %v2371 = vadd.f32 %v2162, %v2370
  %2372 = vmatprep.mubr.f32.mxu0 %v1526
  %2373 = vmatmul.mubr.f32.gmra.mrb[0].mxu0 %v1525
  %v2374 = vpop.f32.mrb[0].mxu0
  %v2375 = vadd.f32 %v2166, %v2374
  %v2376 = vpop.f32.mrb[0].mxu0
  %v2377 = vadd.f32 %v2168, %v2376
  %2378 = vmatprep.mubr.f32.mxu0 %v1533
  %2379 = vmatmul.mubr.f32.gmra.mrb[0].mxu0 %v1532
  %v2380 = vpop.f32.mrb[0].mxu0
  %v2381 = vadd.f32 %v2172, %v2380
  %v2382 = vpop.f32.mrb[0].mxu0
  %v2383 = vadd.f32 %v2174, %v2382
  %2384 = vmatprep.mubr.f32.mxu0 %v1540
  %2385 = vmatmul.mubr.f32.gmra.mrb[0].mxu0 %v1539
  %v2386 = vpop.f32.mrb[0].mxu0
  %v2387 = vadd.f32 %v2178, %v2386
  %v2388 = vpop.f32.mrb[0].mxu0
  %v2389 = vadd.f32 %v2180, %v2388
  %2390 = vmatprep.mubr.f32.mxu0 %v1547
  %2391 = vmatmul.mubr.f32.gmra.mrb[0].mxu0 %v1546
  %v2392 = vpop.f32.mrb[0].mxu0
  %v2393 = vadd.f32 %v2184, %v2392
  %v2394 = vpop.f32.mrb[0].mxu0
  %v2395 = vadd.f32 %v2186, %v2394
  %2396 = vmatprep.mubr.f32.mxu0 %v1554
  %2397 = vmatmul.mubr.f32.gmra.mrb[0].mxu0 %v1553
  %v2398 = vpop.f32.mrb[0].mxu0
  %v2399 = vadd.f32 %v2190, %v2398
  %v2400 = vpop.f32.mrb[0].mxu0
  %v2401 = vadd.f32 %v2192, %v2400
  %2402 = vmatprep.mubr.f32.mxu0 %v1561
  %2403 = vmatmul.mubr.f32.gmra.mrb[0].mxu0 %v1560
  %v2404 = vpop.f32.mrb[0].mxu0
  %v2405 = vadd.f32 %v2196, %v2404
  %v2406 = vpop.f32.mrb[0].mxu0
  %v2407 = vadd.f32 %v2198, %v2406
  %2408 = vmatprep.mubr.f32.mxu0 %v1568
  %2409 = vmatmul.mubr.f32.gmra.mrb[0].mxu0 %v1567
  %v2410 = vpop.f32.mrb[0].mxu0
  %v2411 = vadd.f32 %v2202, %v2410
  %v2412 = vpop.f32.mrb[0].mxu0
  %v2413 = vadd.f32 %v2204, %v2412
  %2414 = vmatprep.mubr.f32.mxu0 %v1575
  %2415 = vmatmul.mubr.f32.gmra.mrb[0].mxu0 %v1574
  %v2416 = vpop.f32.mrb[0].mxu0
  %v2417 = vadd.f32 %v2208, %v2416
  %v2418 = vpop.f32.mrb[0].mxu0
  %v2419 = vadd.f32 %v2210, %v2418
  %2420 = vdwg.mxu0
  %2421 = vmatprep.subr.mxu0 %v1290
  %2422 = vmatpush1.msra.mxu0 %v1289
  %2423 = vmatprep.subr.mxu0 %v1292
  %2424 = vmatpush1.msra.mxu0 %v1291
  %2425 = vmatprep.subr.mxu0 %v1294
  %2426 = vmatpush1.msra.mxu0 %v1293
  %2427 = vmatprep.subr.mxu0 %v1296
  %2428 = vmatpush1.msra.mxu0 %v1295
  %2429 = vmatprep.subr.mxu0 %v1298
  %2430 = vmatpush1.msra.mxu0 %v1297
  %2431 = vmatprep.subr.mxu0 %v1300
  %2432 = vmatpush1.msra.mxu0 %v1299
  %2433 = vmatprep.subr.mxu0 %v1302
  %2434 = vmatpush1.msra.mxu0 %v1301
  %2435 = vmatprep.subr.mxu0 %v1304
  %2436 = vmatpush1.msra.mxu0 %v1303
  %2437 = vmatprep.subr.mxu0 %v1306
  %2438 = vmatpush1.msra.mxu0 %v1305
  %2439 = vmatprep.subr.mxu0 %v1308
  %2440 = vmatpush1.msra.mxu0 %v1307
  %2441 = vmatprep.subr.mxu0 %v1310
  %2442 = vmatpush1.msra.mxu0 %v1309
  %2443 = vmatprep.subr.mxu0 %v1312
  %2444 = vmatpush1.msra.mxu0 %v1311
  %2445 = vmatprep.subr.mxu0 0.0
  %2446 = vmatpush1.msra.mxu0 0.0
  %2447 = vmatprep.subr.mxu0 0.0
  %2448 = vmatpush1.msra.mxu0 0.0
  %2449 = vmatprep.subr.mxu0 0.0
  %2450 = vmatpush1.msra.mxu0 0.0
  %2451 = vmatprep.subr.mxu0 0.0
  %2452 = vmatpush1.msra.mxu0 0.0
  %2453 = vmatprep.subr.mxu0 0.0
  %2454 = vmatpush1.msra.mxu0 0.0
  %2455 = vmatprep.subr.mxu0 0.0
  %2456 = vmatpush1.msra.mxu0 0.0
  %2457 = vmatprep.subr.mxu0 0.0
  %2458 = vmatpush1.msra.mxu0 0.0
  %2459 = vmatprep.subr.mxu0 0.0
  %2460 = vmatpush1.msra.mxu0 0.0
  %2461 = vmatprep.subr.mxu0 0.0
  %2462 = vmatpush1.msra.mxu0 0.0
  %2463 = vmatprep.subr.mxu0 0.0
  %2464 = vmatpush1.msra.mxu0 0.0
  %2465 = vmatprep.subr.mxu0 0.0
  %2466 = vmatpush1.msra.mxu0 0.0
  %2467 = vmatprep.subr.mxu0 0.0
  %2468 = vmatpush1.msra.mxu0 0.0
  %2469 = vmatprep.subr.mxu0 0.0
  %2470 = vmatpush1.msra.mxu0 0.0
  %2471 = vmatprep.subr.mxu0 0.0
  %2472 = vmatpush1.msra.mxu0 0.0
  %2473 = vmatprep.subr.mxu0 0.0
  %2474 = vmatpush1.msra.mxu0 0.0
  %2475 = vmatprep.subr.mxu0 0.0
  %2476 = vmatpush1.msra.mxu0 0.0
  %2477 = vmatprep.subr.mxu0 0.0
  %2478 = vmatpush1.msra.mxu0 0.0
  %2479 = vmatprep.subr.mxu0 0.0
  %2480 = vmatpush1.msra.mxu0 0.0
  %2481 = vmatprep.subr.mxu0 0.0
  %2482 = vmatpush1.msra.mxu0 0.0
  %2483 = vmatprep.subr.mxu0 0.0
  %2484 = vmatpush1.msra.mxu0 0.0
  %2485 = vmatprep.mubr.f32.mxu0 0.0
  %2486 = vmatmul.mubr.f32.gmra.mrb[0].mxu0 %v1723
  %v2487 = vpop.f32.mrb[0].mxu0
  %v2488 = vadd.f32 %v2279, %v2487
  %v2489 = vpop.f32.mrb[0].mxu0
  %v2490 = vadd.f32 %v2281, %v2489
  %2491 = vmatprep.mubr.f32.mxu0 0.0
  %2492 = vmatmul.mubr.f32.gmra.mrb[0].mxu0 %v1726
  %v2493 = vpop.f32.mrb[0].mxu0
  %v2494 = vadd.f32 %v2285, %v2493
  %v2495 = vpop.f32.mrb[0].mxu0
  %v2496 = vadd.f32 %v2287, %v2495
  %2497 = vmatprep.mubr.f32.mxu0 0.0
  %2498 = vmatmul.mubr.f32.gmra.mrb[0].mxu0 %v1729
  %v2499 = vpop.f32.mrb[0].mxu0
  %v2500 = vadd.f32 %v2291, %v2499
  %v2501 = vpop.f32.mrb[0].mxu0
  %v2502 = vadd.f32 %v2293, %v2501
  %2503 = vmatprep.mubr.f32.mxu0 0.0
  %2504 = vmatmul.mubr.f32.gmra.mrb[0].mxu0 %v1732
  %v2505 = vpop.f32.mrb[0].mxu0
  %v2506 = vadd.f32 %v2297, %v2505
  %v2507 = vpop.f32.mrb[0].mxu0
  %v2508 = vadd.f32 %v2299, %v2507
  %2509 = vmatprep.mubr.f32.mxu0 0.0
  %2510 = vmatmul.mubr.f32.gmra.mrb[0].mxu0 %v1735
  %v2511 = vpop.f32.mrb[0].mxu0
  %v2512 = vadd.f32 %v2303, %v2511
  %v2513 = vpop.f32.mrb[0].mxu0
  %v2514 = vadd.f32 %v2305, %v2513
  %2515 = vmatprep.mubr.f32.mxu0 0.0
  %2516 = vmatmul.mubr.f32.gmra.mrb[0].mxu0 %v1738
  %v2517 = vpop.f32.mrb[0].mxu0
  %v2518 = vadd.f32 %v2309, %v2517
  %v2519 = vpop.f32.mrb[0].mxu0
  %v2520 = vadd.f32 %v2311, %v2519
  %2521 = vmatprep.mubr.f32.mxu0 0.0
  %2522 = vmatmul.mubr.f32.gmra.mrb[0].mxu0 %v1741
  %v2523 = vpop.f32.mrb[0].mxu0
  %v2524 = vadd.f32 %v2315, %v2523
  %v2525 = vpop.f32.mrb[0].mxu0
  %v2526 = vadd.f32 %v2317, %v2525
  %2527 = vmatprep.mubr.f32.mxu0 0.0
  %2528 = vmatmul.mubr.f32.gmra.mrb[0].mxu0 %v1744
  %v2529 = vpop.f32.mrb[0].mxu0
  %v2530 = vadd.f32 %v2321, %v2529
  %v2531 = vpop.f32.mrb[0].mxu0
  %v2532 = vadd.f32 %v2323, %v2531
  %2533 = vmatprep.mubr.f32.mxu0 0.0
  %2534 = vmatmul.mubr.f32.gmra.mrb[0].mxu0 %v1747
  %v2535 = vpop.f32.mrb[0].mxu0
  %v2536 = vadd.f32 %v2327, %v2535
  %v2537 = vpop.f32.mrb[0].mxu0
  %v2538 = vadd.f32 %v2329, %v2537
  %2539 = vmatprep.mubr.f32.mxu0 0.0
  %2540 = vmatmul.mubr.f32.gmra.mrb[0].mxu0 %v1750
  %v2541 = vpop.f32.mrb[0].mxu0
  %v2542 = vadd.f32 %v2333, %v2541
  %v2543 = vpop.f32.mrb[0].mxu0
  %v2544 = vadd.f32 %v2335, %v2543
  %2545 = vmatprep.mubr.f32.mxu0 0.0
  %2546 = vmatmul.mubr.f32.gmra.mrb[0].mxu0 %v1753
  %v2547 = vpop.f32.mrb[0].mxu0
  %v2548 = vadd.f32 %v2339, %v2547
  %v2549 = vpop.f32.mrb[0].mxu0
  %v2550 = vadd.f32 %v2341, %v2549
  %2551 = vmatprep.mubr.f32.mxu0 0.0
  %2552 = vmatmul.mubr.f32.gmra.mrb[0].mxu0 %v1756
  %v2553 = vpop.f32.mrb[0].mxu0
  %v2554 = vadd.f32 %v2345, %v2553
  %v2555 = vpop.f32.mrb[0].mxu0
  %v2556 = vadd.f32 %v2347, %v2555
  %2557 = vmatprep.mubr.f32.mxu0 0.0
  %2558 = vmatmul.mubr.f32.gmra.mrb[0].mxu0 %v1759
  %v2559 = vpop.f32.mrb[0].mxu0
  %v2560 = vadd.f32 %v2351, %v2559
  %v2561 = vpop.f32.mrb[0].mxu0
  %v2562 = vadd.f32 %v2353, %v2561
  %2563 = vmatprep.mubr.f32.mxu0 0.0
  %2564 = vmatmul.mubr.f32.gmra.mrb[0].mxu0 %v1762
  %v2565 = vpop.f32.mrb[0].mxu0
  %v2566 = vadd.f32 %v2357, %v2565
  %v2567 = vpop.f32.mrb[0].mxu0
  %v2568 = vadd.f32 %v2359, %v2567
  %2569 = vmatprep.mubr.f32.mxu0 0.0
  %2570 = vmatmul.mubr.f32.gmra.mrb[0].mxu0 %v1765
  %v2571 = vpop.f32.mrb[0].mxu0
  %v2572 = vadd.f32 %v2363, %v2571
  %v2573 = vpop.f32.mrb[0].mxu0
  %v2574 = vadd.f32 %v2365, %v2573
  %2575 = vmatprep.mubr.f32.mxu0 0.0
  %2576 = vmatmul.mubr.f32.gmra.mrb[0].mxu0 %v1768
  %v2577 = vpop.f32.mrb[0].mxu0
  %v2578 = vadd.f32 %v2369, %v2577
  %v2579 = vpop.f32.mrb[0].mxu0
  %v2580 = vadd.f32 %v2371, %v2579
  %2581 = vmatprep.mubr.f32.mxu0 0.0
  %2582 = vmatmul.mubr.f32.gmra.mrb[0].mxu0 %v1771
  %v2583 = vpop.f32.mrb[0].mxu0
  %v2584 = vadd.f32 %v2375, %v2583
  %v2585 = vpop.f32.mrb[0].mxu0
  %v2586 = vadd.f32 %v2377, %v2585
  %2587 = vmatprep.mubr.f32.mxu0 0.0
  %2588 = vmatmul.mubr.f32.gmra.mrb[0].mxu0 %v1774
  %v2589 = vpop.f32.mrb[0].mxu0
  %v2590 = vadd.f32 %v2381, %v2589
  %v2591 = vpop.f32.mrb[0].mxu0
  %v2592 = vadd.f32 %v2383, %v2591
  %2593 = vmatprep.mubr.f32.mxu0 0.0
  %2594 = vmatmul.mubr.f32.gmra.mrb[0].mxu0 %v1777
  %v2595 = vpop.f32.mrb[0].mxu0
  %v2596 = vadd.f32 %v2387, %v2595
  %v2597 = vpop.f32.mrb[0].mxu0
  %v2598 = vadd.f32 %v2389, %v2597
  %2599 = vmatprep.mubr.f32.mxu0 0.0
  %2600 = vmatmul.mubr.f32.gmra.mrb[0].mxu0 %v1780
  %v2601 = vpop.f32.mrb[0].mxu0
  %v2602 = vadd.f32 %v2393, %v2601
  %v2603 = vpop.f32.mrb[0].mxu0
  %v2604 = vadd.f32 %v2395, %v2603
  %2605 = vmatprep.mubr.f32.mxu0 0.0
  %2606 = vmatmul.mubr.f32.gmra.mrb[0].mxu0 %v1783
  %v2607 = vpop.f32.mrb[0].mxu0
  %v2608 = vadd.f32 %v2399, %v2607
  %v2609 = vpop.f32.mrb[0].mxu0
  %v2610 = vadd.f32 %v2401, %v2609
  %2611 = vmatprep.mubr.f32.mxu0 0.0
  %2612 = vmatmul.mubr.f32.gmra.mrb[0].mxu0 %v1786
  %v2613 = vpop.f32.mrb[0].mxu0
  %v2614 = vadd.f32 %v2405, %v2613
  %v2615 = vpop.f32.mrb[0].mxu0
  %v2616 = vadd.f32 %v2407, %v2615
  %2617 = vmatprep.mubr.f32.mxu0 0.0
  %2618 = vmatmul.mubr.f32.gmra.mrb[0].mxu0 %v1789
  %v2619 = vpop.f32.mrb[0].mxu0
  %v2620 = vadd.f32 %v2411, %v2619
  %v2621 = vpop.f32.mrb[0].mxu0
  %v2622 = vadd.f32 %v2413, %v2621
  %2623 = vmatprep.mubr.f32.mxu0 0.0
  %2624 = vmatmul.mubr.f32.gmra.mrb[0].mxu0 %v1792
  %v2625 = vpop.f32.mrb[0].mxu0
  %v2626 = vadd.f32 %v2417, %v2625
  %v2627 = vpop.f32.mrb[0].mxu0
  %v2628 = vadd.f32 %v2419, %v2627
  %2629 = vdwg.mxu0
  %v2630 = vmax.f32 %v2488, 0.0
  %v2631 = vmax.f32 %v2490, 0.0
  %v2632 = vmax.f32 %v2494, 0.0
  %v2633 = vmax.f32 %v2496, 0.0
  %v2634 = vmax.f32 %v2500, 0.0
  %v2635 = vmax.f32 %v2502, 0.0
  %v2636 = vmax.f32 %v2506, 0.0
  %v2637 = vmax.f32 %v2508, 0.0
  %v2638 = vmax.f32 %v2512, 0.0
  %v2639 = vmax.f32 %v2514, 0.0
  %v2640 = vmax.f32 %v2518, 0.0
  %v2641 = vmax.f32 %v2520, 0.0
  %v2642 = vmax.f32 %v2524, 0.0
  %v2643 = vmax.f32 %v2526, 0.0
  %v2644 = vmax.f32 %v2530, 0.0
  %v2645 = vmax.f32 %v2532, 0.0
  %v2646 = vmax.f32 %v2536, 0.0
  %v2647 = vmax.f32 %v2538, 0.0
  %v2648 = vmax.f32 %v2542, 0.0
  %v2649 = vmax.f32 %v2544, 0.0
  %v2650 = vmax.f32 %v2548, 0.0
  %v2651 = vmax.f32 %v2550, 0.0
  %v2652 = vmax.f32 %v2554, 0.0
  %v2653 = vmax.f32 %v2556, 0.0
  %v2654 = vmax.f32 %v2560, 0.0
  %v2655 = vmax.f32 %v2562, 0.0
  %v2656 = vmax.f32 %v2566, 0.0
  %v2657 = vmax.f32 %v2568, 0.0
  %v2658 = vmax.f32 %v2572, 0.0
  %v2659 = vmax.f32 %v2574, 0.0
  %v2660 = vmax.f32 %v2578, 0.0
  %v2661 = vmax.f32 %v2580, 0.0
  %v2662 = vmax.f32 %v2584, 0.0
  %v2663 = vmax.f32 %v2586, 0.0
  %v2664 = vmax.f32 %v2590, 0.0
  %v2665 = vmax.f32 %v2592, 0.0
  %v2666 = vmax.f32 %v2596, 0.0
  %v2667 = vmax.f32 %v2598, 0.0
  %v2668 = vmax.f32 %v2602, 0.0
  %v2669 = vmax.f32 %v2604, 0.0
  %v2670 = vmax.f32 %v2608, 0.0
  %v2671 = vmax.f32 %v2610, 0.0
  %v2672 = vmax.f32 %v2614, 0.0
  %v2673 = vmax.f32 %v2616, 0.0
  %v2674 = vmax.f32 %v2620, 0.0
  %v2675 = vmax.f32 %v2622, 0.0
  %v2676 = vmax.f32 %v2626, 0.0
  %v2677 = vmax.f32 %v2628, 0.0
  %2678 = vst [vmem:[%s4] sm:$0xff] %v2630
  %vm2679 = vcmask 556032
  %2680 = vst.msk [vmem:[%s4 + $0x8] sm:$0xff] %vm2679, %v2631
  %2681 = vst [vmem:[%s4 + $0x10] sm:$0xff] %v2632
  %2682 = vst.msk [vmem:[%s4 + $0x18] sm:$0xff] %vm2679, %v2633
  %2683 = vst [vmem:[%s4 + $0x20] sm:$0xff] %v2634
  %2684 = vst.msk [vmem:[%s4 + $0x28] sm:$0xff] %vm2679, %v2635
  %2685 = vst [vmem:[%s4 + $0x30] sm:$0xff] %v2636
  %2686 = vst.msk [vmem:[%s4 + $0x38] sm:$0xff] %vm2679, %v2637
  %2687 = vst [vmem:[%s4 + $0x40] sm:$0xff] %v2638
  %2688 = vst.msk [vmem:[%s4 + $0x48] sm:$0xff] %vm2679, %v2639
  %2689 = vst [vmem:[%s4 + $0x50] sm:$0xff] %v2640
  %2690 = vst.msk [vmem:[%s4 + $0x58] sm:$0xff] %vm2679, %v2641
  %2691 = vst [vmem:[%s4 + $0x60] sm:$0xff] %v2642
  %2692 = vst.msk [vmem:[%s4 + $0x68] sm:$0xff] %vm2679, %v2643
  %2693 = vst [vmem:[%s4 + $0x70] sm:$0xff] %v2644
  %2694 = vst.msk [vmem:[%s4 + $0x78] sm:$0xff] %vm2679, %v2645
  %2695 = vst [vmem:[%s4 + $0x80] sm:$0xff] %v2646
  %2696 = vst.msk [vmem:[%s4 + $0x88] sm:$0xff] %vm2679, %v2647
  %2697 = vst [vmem:[%s4 + $0x90] sm:$0xff] %v2648
  %2698 = vst.msk [vmem:[%s4 + $0x98] sm:$0xff] %vm2679, %v2649
  %2699 = vst [vmem:[%s4 + $0xa0] sm:$0xff] %v2650
  %2700 = vst.msk [vmem:[%s4 + $0xa8] sm:$0xff] %vm2679, %v2651
  %2701 = vst [vmem:[%s4 + $0xb0] sm:$0xff] %v2652
  %2702 = vst.msk [vmem:[%s4 + $0xb8] sm:$0xff] %vm2679, %v2653
  %2703 = vst [vmem:[%s4 + $0xc0] sm:$0xff] %v2654
  %2704 = vst.msk [vmem:[%s4 + $0xc8] sm:$0xff] %vm2679, %v2655
  %2705 = vst [vmem:[%s4 + $0xd0] sm:$0xff] %v2656
  %2706 = vst.msk [vmem:[%s4 + $0xd8] sm:$0xff] %vm2679, %v2657
  %2707 = vst [vmem:[%s4 + $0xe0] sm:$0xff] %v2658
  %2708 = vst.msk [vmem:[%s4 + $0xe8] sm:$0xff] %vm2679, %v2659
  %2709 = vst [vmem:[%s4 + $0xf0] sm:$0xff] %v2660
  %2710 = vst.msk [vmem:[%s4 + $0xf8] sm:$0xff] %vm2679, %v2661
  %2711 = vst [vmem:[%s4 + $0x100] sm:$0xff] %v2662
  %2712 = vst.msk [vmem:[%s4 + $0x108] sm:$0xff] %vm2679, %v2663
  %2713 = vst [vmem:[%s4 + $0x110] sm:$0xff] %v2664
  %2714 = vst.msk [vmem:[%s4 + $0x118] sm:$0xff] %vm2679, %v2665
  %2715 = vst [vmem:[%s4 + $0x120] sm:$0xff] %v2666
  %2716 = vst.msk [vmem:[%s4 + $0x128] sm:$0xff] %vm2679, %v2667
  %2717 = vst [vmem:[%s4 + $0x130] sm:$0xff] %v2668
  %2718 = vst.msk [vmem:[%s4 + $0x138] sm:$0xff] %vm2679, %v2669
  %2719 = vst [vmem:[%s4 + $0x140] sm:$0xff] %v2670
  %2720 = vst.msk [vmem:[%s4 + $0x148] sm:$0xff] %vm2679, %v2671
  %2721 = vst [vmem:[%s4 + $0x150] sm:$0xff] %v2672
  %2722 = vst.msk [vmem:[%s4 + $0x158] sm:$0xff] %vm2679, %v2673
  %2723 = vst [vmem:[%s4 + $0x160] sm:$0xff] %v2674
  %2724 = vst.msk [vmem:[%s4 + $0x168] sm:$0xff] %vm2679, %v2675
  %2725 = vst [vmem:[%s4 + $0x170] sm:$0xff] %v2676
  %2726 = vst.msk [vmem:[%s4 + $0x178] sm:$0xff] %vm2679, %v2677
  // Predicated region
  $region18: #{fused.1} parent=0 // pred_check
    _
  $region19: #{fused.1} parent=0 // pred_check_branch
    %2728 = sbr.rel (0) target = $region21
  $region20: #{fused.1} parent=0 // pred_region
    _
  $region21: #{fused.1} parent=0 // pred_fallthru
    _
  // Predicated region
  $region22: #{fused.1} parent=0 // pred_check
    _
  $region23: #{fused.1} parent=0 // pred_check_branch
    %2730 = sbr.rel (0) target = $region25
  $region24: #{fused.1} parent=0 // pred_region
    _
  $region25: #{fused.1} parent=0 // pred_fallthru
    _

</llo_original>
